<compile_context>
chip_gen: v5e
topology: v5e:2x2
jax: 0.10.0
libtpu: 0.0.40
codegen_flags: <defaults>
</compile_context>

<pallas_src>
import functools
import random as pyrandom

import jax
import jax.numpy as jnp
from jax.experimental import pallas as pl
from jax.experimental.pallas import tpu as pltpu


def _conv_kernel(x_ref, w_ref, b_ref, o_ref, xpk_ref, *, C, H, W, K, BT):
    # x_ref:   VMEM (BT, C, H, W)       native-layout batch tile
    # w_ref:   VMEM (C*C*K*K, BT*W)     per-lane weights (edge lanes zeroed for W pad)
    # b_ref:   VMEM (C, BT*W)           per-lane bias
    # o_ref:   VMEM (C, H, BT*W)        lane-dense output (lane = b*W + j)
    # xpk_ref: VMEM (C, H+2, BT*W+2)    scratch: lane-packed, zero-bordered input
    LN = BT * W

    # --- initialize only the scratch borders (interior is fully overwritten by the
    #     pack stores below).  Top/bottom rows implement vertical zero padding; the
    #     two guard lane columns are read by the shifted slices but always hit
    #     zeroed weights, so they only need to be finite (not stale VMEM garbage).
    zrow = jnp.zeros((C, 1, LN + 2), jnp.float32)
    zcol = jnp.zeros((C, H + 2, 1), jnp.float32)
    xpk_ref[:, pl.ds(0, 1), :] = zrow
    xpk_ref[:, pl.ds(H + 1, 1), :] = zrow
    xpk_ref[:, :, pl.ds(0, 1)] = zcol
    xpk_ref[:, :, pl.ds(LN + 1, 1)] = zcol

    # Pack the batch tile along lanes: sample b, column j lands at lane 1 + b*W + j,
    # rows shifted down by one (row 0 / row H+1 stay zero = vertical padding).
    for b in range(BT):
        for ci in range(C):
            xpk_ref[ci, pl.ds(1, H), pl.ds(1 + b * W, W)] = x_ref[b, ci, :, :]

    # Persistent accumulators (one per output channel), seeded from the per-lane bias.
    accs = [jnp.broadcast_to(b_ref[pl.ds(co, 1), :], (H, LN)) for co in range(C)]

    # 3x3 conv as shifted MACs on the VPU.  Loop order: ci / (kh, kw) outer so each
    # shifted patch is extracted exactly once and reused for all C output channels.
    for ci in range(C):
        for kh in range(K):
            for kw in range(K):
                patch = xpk_ref[ci, pl.ds(kh, H), pl.ds(kw, LN)]
                for co in range(C):
                    t = ((co * C + ci) * K + kh) * K + kw
                    accs[co] = accs[co] + w_ref[pl.ds(t, 1), :] * patch

    for co in range(C):
        o_ref[co, :, :] = accs[co].astype(o_ref.dtype)


def random_aug_list_forward(img, weights, bias, allocation, *, block_b=None):
    """img: (B, C, H, W) f32; weights: (A, C, C, K, K); bias: (A, C);
    allocation: (B,) int32 (distinct aug index per sample, module semantics)."""
    B, C, H, W = img.shape
    A = weights.shape[0]
    K = weights.shape[-1]
    assert weights.shape == (A, C, C, K, K)
    pad = K // 2

    if block_b is None:
        block_b = B
    assert B % block_b == 0
    # Lane blocks must either span the full lane axis or be a multiple of 128 lanes.
    assert block_b == B or (block_b * W) % 128 == 0
    TAPS = C * C * K * K
    LN = block_b * W

    # --- wrapper-side parameter gather / per-lane expansion (tiny arrays) ---
    w_sel = weights[allocation].astype(jnp.float32)       # (B, C, C, K, K)
    b_sel = bias[allocation].astype(jnp.float32)          # (B, C)

    # Horizontal zero-padding folded into weights: tap column offset d = kw - pad is
    # invalid where j + d falls outside [0, W); zero those lanes' weights.
    j = jnp.arange(W)
    kw = jnp.arange(K)
    valid = ((j[None, :] + kw[:, None] - pad) >= 0) & ((j[None, :] + kw[:, None] - pad) < W)
    mask = valid.astype(jnp.float32)                                   # (K, W)

    wl = w_sel[..., None] * mask[None, None, None, None, :, :]         # (B,C,C,K,K,W)
    wl = jnp.transpose(wl, (1, 2, 3, 4, 0, 5)).reshape(TAPS, B * W)    # lane = b*W + j
    bl = jnp.repeat(b_sel.T, W, axis=1)                                # (C, B*W)

    kernel = functools.partial(_conv_kernel, C=C, H=H, W=W, K=K, BT=block_b)

    grid_spec = pltpu.PrefetchScalarGridSpec(
        num_scalar_prefetch=0,
        grid=(B // block_b,),
        in_specs=[
            pl.BlockSpec((block_b, C, H, W), lambda t: (t, 0, 0, 0)),
            pl.BlockSpec((TAPS, LN), lambda t: (0, t)),
            pl.BlockSpec((C, LN), lambda t: (0, t)),
        ],
        out_specs=pl.BlockSpec((C, H, LN), lambda t: (0, 0, t)),
        scratch_shapes=[pltpu.VMEM((C, H + 2, LN + 2), jnp.float32)],
    )

    out_packed = pl.pallas_call(
        kernel,
        out_shape=jax.ShapeDtypeStruct((C, H, B * W), jnp.float32),
        grid_spec=grid_spec,
        compiler_params=pltpu.CompilerParams(
            dimension_semantics=("parallel",)),
    )(img.astype(jnp.float32), wl, bl)

    # Layout plumbing back to the module's (B, C, H, W) output.
    return jnp.transpose(out_packed.reshape(C, H, B, W), (2, 0, 1, 3))


def _reference(img, weights, bias, allocation):
    outs = []
    for i in range(img.shape[0]):
        a = int(allocation[i])
        y = jax.lax.conv_general_dilated(
            img[i:i + 1], weights[a], window_strides=(1, 1), padding="SAME",
            dimension_numbers=("NCHW", "OIHW", "NCHW"))
        outs.append(y + bias[a][None, :, None, None])
    return jnp.concatenate(outs, axis=0)


if __name__ == "__main__":
    B, C, H, W = 2, 3, 16, 16
    num_augs = 4
    # hid_dim is unused by the module's forward (Conv2d(3, 3, 3) regardless).

    key = jax.random.PRNGKey(0)
    k_img, k_w, k_b = jax.random.split(key, 3)

    img = jax.random.normal(k_img, (B, C, H, W), dtype=jnp.float32)
    weights = 0.1 * jax.random.normal(k_w, (num_augs, C, C, 3, 3), dtype=jnp.float32)
    bias = 0.1 * jax.random.normal(k_b, (num_augs, C), dtype=jnp.float32)

    # TODO(synk): random.sample (host-side Python RNG, without replacement) has no
    # in-kernel equivalent; it is reproduced deterministically in the wrapper.
    allocation = jnp.array(pyrandom.Random(0).sample(range(num_augs), B),
                           dtype=jnp.int32)

    fwd = jax.jit(random_aug_list_forward)
    out = jax.block_until_ready(fwd(img, weights, bias, allocation))

    ref = _reference(img, weights, bias, jax.device_get(allocation))
    assert out.shape == (B, C, H, W)
    assert jnp.allclose(out, ref, atol=1e-5, rtol=1e-5)
    print("KERNEL_OK")
</pallas_src>

<mosaic_0001>
module attributes {stable_mosaic.version = 11 : i64} {
  func.func @_conv_kernel(%arg0: i32, %arg1: memref<2x3x16x16xf32, #tpu.memory_space<vmem>>, %arg2: memref<81x32xf32, #tpu.memory_space<vmem>>, %arg3: memref<3x32xf32, #tpu.memory_space<vmem>>, %arg4: memref<3x16x32xf32, #tpu.memory_space<vmem>>, %arg5: memref<3x18x34xf32, #tpu.memory_space<vmem>>) attributes {dimension_semantics = [#tpu.dimension_semantics<parallel>], iteration_bounds = array<i64: 1>, scalar_prefetch = 0 : i64, scratch_operands = 1 : i64, tpu.core_type = #tpu.core_type<tc>, window_params = [{transform_indices = @transform_0, window_bounds = array<i64: 2, 3, 16, 16>}, {transform_indices = @transform_1, window_bounds = array<i64: 81, 32>}, {transform_indices = @transform_2, window_bounds = array<i64: 3, 32>}, {transform_indices = @transform_3, window_bounds = array<i64: 3, 16, 32>}]} {
    %cst = arith.constant 0.000000e+00 : f32
    %0 = vector.broadcast %cst : f32 to vector<3x1x34xf32>
    %cst_0 = arith.constant 0.000000e+00 : f32
    %1 = vector.broadcast %cst_0 : f32 to vector<3x18x1xf32>
    %c0 = arith.constant 0 : index
    %c0_1 = arith.constant 0 : index
    %c0_2 = arith.constant 0 : index
    %2 = vector.load %arg5[%c0, %c0_1, %c0_2] : memref<3x18x34xf32, #tpu.memory_space<vmem>>, vector<3x1x34xf32>
    tpu.vector_store %arg5[%c0, %c0_1, %c0_2], %0 {strides = array<i32>} : memref<3x18x34xf32, #tpu.memory_space<vmem>>, vector<3x1x34xf32>,
    %c0_3 = arith.constant 0 : index
    %c17 = arith.constant 17 : index
    %c0_4 = arith.constant 0 : index
    %3 = vector.load %arg5[%c0_3, %c17, %c0_4] : memref<3x18x34xf32, #tpu.memory_space<vmem>>, vector<3x1x34xf32>
    tpu.vector_store %arg5[%c0_3, %c17, %c0_4], %0 {strides = array<i32>} : memref<3x18x34xf32, #tpu.memory_space<vmem>>, vector<3x1x34xf32>,
    %c0_5 = arith.constant 0 : index
    %c0_6 = arith.constant 0 : index
    %c0_7 = arith.constant 0 : index
    %4 = vector.load %arg5[%c0_5, %c0_6, %c0_7] : memref<3x18x34xf32, #tpu.memory_space<vmem>>, vector<3x18x1xf32>
    tpu.vector_store %arg5[%c0_5, %c0_6, %c0_7], %1 {strides = array<i32>} : memref<3x18x34xf32, #tpu.memory_space<vmem>>, vector<3x18x1xf32>,
    %c0_8 = arith.constant 0 : index
    %c0_9 = arith.constant 0 : index
    %c33 = arith.constant 33 : index
    %5 = vector.load %arg5[%c0_8, %c0_9, %c33] : memref<3x18x34xf32, #tpu.memory_space<vmem>>, vector<3x18x1xf32>
    tpu.vector_store %arg5[%c0_8, %c0_9, %c33], %1 {strides = array<i32>} : memref<3x18x34xf32, #tpu.memory_space<vmem>>, vector<3x18x1xf32>,
    %c0_10 = arith.constant 0 : index
    %c0_11 = arith.constant 0 : index
    %c0_12 = arith.constant 0 : index
    %c0_13 = arith.constant 0 : index
    %6 = vector.load %arg1[%c0_10, %c0_11, %c0_12, %c0_13] : memref<2x3x16x16xf32, #tpu.memory_space<vmem>>, vector<1x1x16x16xf32>
    %7 = vector.shape_cast %6 : vector<1x1x16x16xf32> to vector<16x16xf32>
    %c0_14 = arith.constant 0 : index
    %c1 = arith.constant 1 : index
    %c1_15 = arith.constant 1 : index
    %8 = vector.load %arg5[%c0_14, %c1, %c1_15] : memref<3x18x34xf32, #tpu.memory_space<vmem>>, vector<1x16x16xf32>
    %9 = vector.shape_cast %8 : vector<1x16x16xf32> to vector<16x16xf32>
    %10 = vector.shape_cast %7 : vector<16x16xf32> to vector<1x16x16xf32>
    tpu.vector_store %arg5[%c0_14, %c1, %c1_15], %10 {strides = array<i32>} : memref<3x18x34xf32, #tpu.memory_space<vmem>>, vector<1x16x16xf32>,
    %c0_16 = arith.constant 0 : index
    %c1_17 = arith.constant 1 : index
    %c0_18 = arith.constant 0 : index
    %c0_19 = arith.constant 0 : index
    %11 = vector.load %arg1[%c0_16, %c1_17, %c0_18, %c0_19] : memref<2x3x16x16xf32, #tpu.memory_space<vmem>>, vector<1x1x16x16xf32>
    %12 = vector.shape_cast %11 : vector<1x1x16x16xf32> to vector<16x16xf32>
    %c1_20 = arith.constant 1 : index
    %c1_21 = arith.constant 1 : index
    %c1_22 = arith.constant 1 : index
    %13 = vector.load %arg5[%c1_20, %c1_21, %c1_22] : memref<3x18x34xf32, #tpu.memory_space<vmem>>, vector<1x16x16xf32>
    %14 = vector.shape_cast %13 : vector<1x16x16xf32> to vector<16x16xf32>
    %15 = vector.shape_cast %12 : vector<16x16xf32> to vector<1x16x16xf32>
    tpu.vector_store %arg5[%c1_20, %c1_21, %c1_22], %15 {strides = array<i32>} : memref<3x18x34xf32, #tpu.memory_space<vmem>>, vector<1x16x16xf32>,
    %c0_23 = arith.constant 0 : index
    %c2 = arith.constant 2 : index
    %c0_24 = arith.constant 0 : index
    %c0_25 = arith.constant 0 : index
    %16 = vector.load %arg1[%c0_23, %c2, %c0_24, %c0_25] : memref<2x3x16x16xf32, #tpu.memory_space<vmem>>, vector<1x1x16x16xf32>
    %17 = vector.shape_cast %16 : vector<1x1x16x16xf32> to vector<16x16xf32>
    %c2_26 = arith.constant 2 : index
    %c1_27 = arith.constant 1 : index
    %c1_28 = arith.constant 1 : index
    %18 = vector.load %arg5[%c2_26, %c1_27, %c1_28] : memref<3x18x34xf32, #tpu.memory_space<vmem>>, vector<1x16x16xf32>
    %19 = vector.shape_cast %18 : vector<1x16x16xf32> to vector<16x16xf32>
    %20 = vector.shape_cast %17 : vector<16x16xf32> to vector<1x16x16xf32>
    tpu.vector_store %arg5[%c2_26, %c1_27, %c1_28], %20 {strides = array<i32>} : memref<3x18x34xf32, #tpu.memory_space<vmem>>, vector<1x16x16xf32>,
    %c1_29 = arith.constant 1 : index
    %c0_30 = arith.constant 0 : index
    %c0_31 = arith.constant 0 : index
    %c0_32 = arith.constant 0 : index
    %21 = vector.load %arg1[%c1_29, %c0_30, %c0_31, %c0_32] : memref<2x3x16x16xf32, #tpu.memory_space<vmem>>, vector<1x1x16x16xf32>
    %22 = vector.shape_cast %21 : vector<1x1x16x16xf32> to vector<16x16xf32>
    %c0_33 = arith.constant 0 : index
    %c1_34 = arith.constant 1 : index
    %c17_35 = arith.constant 17 : index
    %23 = vector.load %arg5[%c0_33, %c1_34, %c17_35] : memref<3x18x34xf32, #tpu.memory_space<vmem>>, vector<1x16x16xf32>
    %24 = vector.shape_cast %23 : vector<1x16x16xf32> to vector<16x16xf32>
    %25 = vector.shape_cast %22 : vector<16x16xf32> to vector<1x16x16xf32>
    tpu.vector_store %arg5[%c0_33, %c1_34, %c17_35], %25 {strides = array<i32>} : memref<3x18x34xf32, #tpu.memory_space<vmem>>, vector<1x16x16xf32>,
    %c1_36 = arith.constant 1 : index
    %c1_37 = arith.constant 1 : index
    %c0_38 = arith.constant 0 : index
    %c0_39 = arith.constant 0 : index
    %26 = vector.load %arg1[%c1_36, %c1_37, %c0_38, %c0_39] : memref<2x3x16x16xf32, #tpu.memory_space<vmem>>, vector<1x1x16x16xf32>
    %27 = vector.shape_cast %26 : vector<1x1x16x16xf32> to vector<16x16xf32>
    %c1_40 = arith.constant 1 : index
    %c1_41 = arith.constant 1 : index
    %c17_42 = arith.constant 17 : index
    %28 = vector.load %arg5[%c1_40, %c1_41, %c17_42] : memref<3x18x34xf32, #tpu.memory_space<vmem>>, vector<1x16x16xf32>
    %29 = vector.shape_cast %28 : vector<1x16x16xf32> to vector<16x16xf32>
    %30 = vector.shape_cast %27 : vector<16x16xf32> to vector<1x16x16xf32>
    tpu.vector_store %arg5[%c1_40, %c1_41, %c17_42], %30 {strides = array<i32>} : memref<3x18x34xf32, #tpu.memory_space<vmem>>, vector<1x16x16xf32>,
    %c1_43 = arith.constant 1 : index
    %c2_44 = arith.constant 2 : index
    %c0_45 = arith.constant 0 : index
    %c0_46 = arith.constant 0 : index
    %31 = vector.load %arg1[%c1_43, %c2_44, %c0_45, %c0_46] : memref<2x3x16x16xf32, #tpu.memory_space<vmem>>, vector<1x1x16x16xf32>
    %32 = vector.shape_cast %31 : vector<1x1x16x16xf32> to vector<16x16xf32>
    %c2_47 = arith.constant 2 : index
    %c1_48 = arith.constant 1 : index
    %c17_49 = arith.constant 17 : index
    %33 = vector.load %arg5[%c2_47, %c1_48, %c17_49] : memref<3x18x34xf32, #tpu.memory_space<vmem>>, vector<1x16x16xf32>
    %34 = vector.shape_cast %33 : vector<1x16x16xf32> to vector<16x16xf32>
    %35 = vector.shape_cast %32 : vector<16x16xf32> to vector<1x16x16xf32>
    tpu.vector_store %arg5[%c2_47, %c1_48, %c17_49], %35 {strides = array<i32>} : memref<3x18x34xf32, #tpu.memory_space<vmem>>, vector<1x16x16xf32>,
    %c0_50 = arith.constant 0 : index
    %c0_51 = arith.constant 0 : index
    %36 = vector.load %arg3[%c0_50, %c0_51] : memref<3x32xf32, #tpu.memory_space<vmem>>, vector<1x32xf32>
    %37 = vector.shape_cast %36 : vector<1x32xf32> to vector<1x32xf32>
    %38 = vector.broadcast %37 : vector<1x32xf32> to vector<16x32xf32>
    %c1_52 = arith.constant 1 : index
    %c0_53 = arith.constant 0 : index
    %39 = vector.load %arg3[%c1_52, %c0_53] : memref<3x32xf32, #tpu.memory_space<vmem>>, vector<1x32xf32>
    %40 = vector.shape_cast %39 : vector<1x32xf32> to vector<1x32xf32>
    %41 = vector.broadcast %40 : vector<1x32xf32> to vector<16x32xf32>
    %c2_54 = arith.constant 2 : index
    %c0_55 = arith.constant 0 : index
    %42 = vector.load %arg3[%c2_54, %c0_55] : memref<3x32xf32, #tpu.memory_space<vmem>>, vector<1x32xf32>
    %43 = vector.shape_cast %42 : vector<1x32xf32> to vector<1x32xf32>
    %44 = vector.broadcast %43 : vector<1x32xf32> to vector<16x32xf32>
    %c0_56 = arith.constant 0 : index
    %c0_57 = arith.constant 0 : index
    %c0_58 = arith.constant 0 : index
    %45 = vector.load %arg5[%c0_56, %c0_57, %c0_58] : memref<3x18x34xf32, #tpu.memory_space<vmem>>, vector<1x16x32xf32>
    %46 = vector.shape_cast %45 : vector<1x16x32xf32> to vector<16x32xf32>
    %c0_59 = arith.constant 0 : index
    %c0_60 = arith.constant 0 : index
    %47 = vector.load %arg2[%c0_59, %c0_60] : memref<81x32xf32, #tpu.memory_space<vmem>>, vector<1x32xf32>
    %48 = vector.broadcast %47 : vector<1x32xf32> to vector<16x32xf32>
    %49 = arith.mulf %48, %46 : vector<16x32xf32>
    %50 = arith.addf %38, %49 : vector<16x32xf32>
    %c27 = arith.constant 27 : index
    %c0_61 = arith.constant 0 : index
    %51 = vector.load %arg2[%c27, %c0_61] : memref<81x32xf32, #tpu.memory_space<vmem>>, vector<1x32xf32>
    %52 = vector.broadcast %51 : vector<1x32xf32> to vector<16x32xf32>
    %53 = arith.mulf %52, %46 : vector<16x32xf32>
    %54 = arith.addf %41, %53 : vector<16x32xf32>
    %c54 = arith.constant 54 : index
    %c0_62 = arith.constant 0 : index
    %55 = vector.load %arg2[%c54, %c0_62] : memref<81x32xf32, #tpu.memory_space<vmem>>, vector<1x32xf32>
    %56 = vector.broadcast %55 : vector<1x32xf32> to vector<16x32xf32>
    %57 = arith.mulf %56, %46 : vector<16x32xf32>
    %58 = arith.addf %44, %57 : vector<16x32xf32>
    %c0_63 = arith.constant 0 : index
    %c0_64 = arith.constant 0 : index
    %c1_65 = arith.constant 1 : index
    %59 = vector.load %arg5[%c0_63, %c0_64, %c1_65] : memref<3x18x34xf32, #tpu.memory_space<vmem>>, vector<1x16x32xf32>
    %60 = vector.shape_cast %59 : vector<1x16x32xf32> to vector<16x32xf32>
    %c1_66 = arith.constant 1 : index
    %c0_67 = arith.constant 0 : index
    %61 = vector.load %arg2[%c1_66, %c0_67] : memref<81x32xf32, #tpu.memory_space<vmem>>, vector<1x32xf32>
    %62 = vector.broadcast %61 : vector<1x32xf32> to vector<16x32xf32>
    %63 = arith.mulf %62, %60 : vector<16x32xf32>
    %64 = arith.addf %50, %63 : vector<16x32xf32>
    %c28 = arith.constant 28 : index
    %c0_68 = arith.constant 0 : index
    %65 = vector.load %arg2[%c28, %c0_68] : memref<81x32xf32, #tpu.memory_space<vmem>>, vector<1x32xf32>
    %66 = vector.broadcast %65 : vector<1x32xf32> to vector<16x32xf32>
    %67 = arith.mulf %66, %60 : vector<16x32xf32>
    %68 = arith.addf %54, %67 : vector<16x32xf32>
    %c55 = arith.constant 55 : index
    %c0_69 = arith.constant 0 : index
    %69 = vector.load %arg2[%c55, %c0_69] : memref<81x32xf32, #tpu.memory_space<vmem>>, vector<1x32xf32>
    %70 = vector.broadcast %69 : vector<1x32xf32> to vector<16x32xf32>
    %71 = arith.mulf %70, %60 : vector<16x32xf32>
    %72 = arith.addf %58, %71 : vector<16x32xf32>
    %c0_70 = arith.constant 0 : index
    %c0_71 = arith.constant 0 : index
    %c2_72 = arith.constant 2 : index
    %73 = vector.load %arg5[%c0_70, %c0_71, %c2_72] : memref<3x18x34xf32, #tpu.memory_space<vmem>>, vector<1x16x32xf32>
    %74 = vector.shape_cast %73 : vector<1x16x32xf32> to vector<16x32xf32>
    %c2_73 = arith.constant 2 : index
    %c0_74 = arith.constant 0 : index
    %75 = vector.load %arg2[%c2_73, %c0_74] : memref<81x32xf32, #tpu.memory_space<vmem>>, vector<1x32xf32>
    %76 = vector.broadcast %75 : vector<1x32xf32> to vector<16x32xf32>
    %77 = arith.mulf %76, %74 : vector<16x32xf32>
    %78 = arith.addf %64, %77 : vector<16x32xf32>
    %c29 = arith.constant 29 : index
    %c0_75 = arith.constant 0 : index
    %79 = vector.load %arg2[%c29, %c0_75] : memref<81x32xf32, #tpu.memory_space<vmem>>, vector<1x32xf32>
    %80 = vector.broadcast %79 : vector<1x32xf32> to vector<16x32xf32>
    %81 = arith.mulf %80, %74 : vector<16x32xf32>
    %82 = arith.addf %68, %81 : vector<16x32xf32>
    %c56 = arith.constant 56 : index
    %c0_76 = arith.constant 0 : index
    %83 = vector.load %arg2[%c56, %c0_76] : memref<81x32xf32, #tpu.memory_space<vmem>>, vector<1x32xf32>
    %84 = vector.broadcast %83 : vector<1x32xf32> to vector<16x32xf32>
    %85 = arith.mulf %84, %74 : vector<16x32xf32>
    %86 = arith.addf %72, %85 : vector<16x32xf32>
    %c0_77 = arith.constant 0 : index
    %c1_78 = arith.constant 1 : index
    %c0_79 = arith.constant 0 : index
    %87 = vector.load %arg5[%c0_77, %c1_78, %c0_79] : memref<3x18x34xf32, #tpu.memory_space<vmem>>, vector<1x16x32xf32>
    %88 = vector.shape_cast %87 : vector<1x16x32xf32> to vector<16x32xf32>
    %c3 = arith.constant 3 : index
    %c0_80 = arith.constant 0 : index
    %89 = vector.load %arg2[%c3, %c0_80] : memref<81x32xf32, #tpu.memory_space<vmem>>, vector<1x32xf32>
    %90 = vector.broadcast %89 : vector<1x32xf32> to vector<16x32xf32>
    %91 = arith.mulf %90, %88 : vector<16x32xf32>
    %92 = arith.addf %78, %91 : vector<16x32xf32>
    %c30 = arith.constant 30 : index
    %c0_81 = arith.constant 0 : index
    %93 = vector.load %arg2[%c30, %c0_81] : memref<81x32xf32, #tpu.memory_space<vmem>>, vector<1x32xf32>
    %94 = vector.broadcast %93 : vector<1x32xf32> to vector<16x32xf32>
    %95 = arith.mulf %94, %88 : vector<16x32xf32>
    %96 = arith.addf %82, %95 : vector<16x32xf32>
    %c57 = arith.constant 57 : index
    %c0_82 = arith.constant 0 : index
    %97 = vector.load %arg2[%c57, %c0_82] : memref<81x32xf32, #tpu.memory_space<vmem>>, vector<1x32xf32>
    %98 = vector.broadcast %97 : vector<1x32xf32> to vector<16x32xf32>
    %99 = arith.mulf %98, %88 : vector<16x32xf32>
    %100 = arith.addf %86, %99 : vector<16x32xf32>
    %c0_83 = arith.constant 0 : index
    %c1_84 = arith.constant 1 : index
    %c1_85 = arith.constant 1 : index
    %101 = vector.load %arg5[%c0_83, %c1_84, %c1_85] : memref<3x18x34xf32, #tpu.memory_space<vmem>>, vector<1x16x32xf32>
    %102 = vector.shape_cast %101 : vector<1x16x32xf32> to vector<16x32xf32>
    %c4 = arith.constant 4 : index
    %c0_86 = arith.constant 0 : index
    %103 = vector.load %arg2[%c4, %c0_86] : memref<81x32xf32, #tpu.memory_space<vmem>>, vector<1x32xf32>
    %104 = vector.broadcast %103 : vector<1x32xf32> to vector<16x32xf32>
    %105 = arith.mulf %104, %102 : vector<16x32xf32>
    %106 = arith.addf %92, %105 : vector<16x32xf32>
    %c31 = arith.constant 31 : index
    %c0_87 = arith.constant 0 : index
    %107 = vector.load %arg2[%c31, %c0_87] : memref<81x32xf32, #tpu.memory_space<vmem>>, vector<1x32xf32>
    %108 = vector.broadcast %107 : vector<1x32xf32> to vector<16x32xf32>
    %109 = arith.mulf %108, %102 : vector<16x32xf32>
    %110 = arith.addf %96, %109 : vector<16x32xf32>
    %c58 = arith.constant 58 : index
    %c0_88 = arith.constant 0 : index
    %111 = vector.load %arg2[%c58, %c0_88] : memref<81x32xf32, #tpu.memory_space<vmem>>, vector<1x32xf32>
    %112 = vector.broadcast %111 : vector<1x32xf32> to vector<16x32xf32>
    %113 = arith.mulf %112, %102 : vector<16x32xf32>
    %114 = arith.addf %100, %113 : vector<16x32xf32>
    %c0_89 = arith.constant 0 : index
    %c1_90 = arith.constant 1 : index
    %c2_91 = arith.constant 2 : index
    %115 = vector.load %arg5[%c0_89, %c1_90, %c2_91] : memref<3x18x34xf32, #tpu.memory_space<vmem>>, vector<1x16x32xf32>
    %116 = vector.shape_cast %115 : vector<1x16x32xf32> to vector<16x32xf32>
    %c5 = arith.constant 5 : index
    %c0_92 = arith.constant 0 : index
    %117 = vector.load %arg2[%c5, %c0_92] : memref<81x32xf32, #tpu.memory_space<vmem>>, vector<1x32xf32>
    %118 = vector.broadcast %117 : vector<1x32xf32> to vector<16x32xf32>
    %119 = arith.mulf %118, %116 : vector<16x32xf32>
    %120 = arith.addf %106, %119 : vector<16x32xf32>
    %c32 = arith.constant 32 : index
    %c0_93 = arith.constant 0 : index
    %121 = vector.load %arg2[%c32, %c0_93] : memref<81x32xf32, #tpu.memory_space<vmem>>, vector<1x32xf32>
    %122 = vector.broadcast %121 : vector<1x32xf32> to vector<16x32xf32>
    %123 = arith.mulf %122, %116 : vector<16x32xf32>
    %124 = arith.addf %110, %123 : vector<16x32xf32>
    %c59 = arith.constant 59 : index
    %c0_94 = arith.constant 0 : index
    %125 = vector.load %arg2[%c59, %c0_94] : memref<81x32xf32, #tpu.memory_space<vmem>>, vector<1x32xf32>
    %126 = vector.broadcast %125 : vector<1x32xf32> to vector<16x32xf32>
    %127 = arith.mulf %126, %116 : vector<16x32xf32>
    %128 = arith.addf %114, %127 : vector<16x32xf32>
    %c0_95 = arith.constant 0 : index
    %c2_96 = arith.constant 2 : index
    %c0_97 = arith.constant 0 : index
    %129 = vector.load %arg5[%c0_95, %c2_96, %c0_97] : memref<3x18x34xf32, #tpu.memory_space<vmem>>, vector<1x16x32xf32>
    %130 = vector.shape_cast %129 : vector<1x16x32xf32> to vector<16x32xf32>
    %c6 = arith.constant 6 : index
    %c0_98 = arith.constant 0 : index
    %131 = vector.load %arg2[%c6, %c0_98] : memref<81x32xf32, #tpu.memory_space<vmem>>, vector<1x32xf32>
    %132 = vector.broadcast %131 : vector<1x32xf32> to vector<16x32xf32>
    %133 = arith.mulf %132, %130 : vector<16x32xf32>
    %134 = arith.addf %120, %133 : vector<16x32xf32>
    %c33_99 = arith.constant 33 : index
    %c0_100 = arith.constant 0 : index
    %135 = vector.load %arg2[%c33_99, %c0_100] : memref<81x32xf32, #tpu.memory_space<vmem>>, vector<1x32xf32>
    %136 = vector.broadcast %135 : vector<1x32xf32> to vector<16x32xf32>
    %137 = arith.mulf %136, %130 : vector<16x32xf32>
    %138 = arith.addf %124, %137 : vector<16x32xf32>
    %c60 = arith.constant 60 : index
    %c0_101 = arith.constant 0 : index
    %139 = vector.load %arg2[%c60, %c0_101] : memref<81x32xf32, #tpu.memory_space<vmem>>, vector<1x32xf32>
    %140 = vector.broadcast %139 : vector<1x32xf32> to vector<16x32xf32>
    %141 = arith.mulf %140, %130 : vector<16x32xf32>
    %142 = arith.addf %128, %141 : vector<16x32xf32>
    %c0_102 = arith.constant 0 : index
    %c2_103 = arith.constant 2 : index
    %c1_104 = arith.constant 1 : index
    %143 = vector.load %arg5[%c0_102, %c2_103, %c1_104] : memref<3x18x34xf32, #tpu.memory_space<vmem>>, vector<1x16x32xf32>
    %144 = vector.shape_cast %143 : vector<1x16x32xf32> to vector<16x32xf32>
    %c7 = arith.constant 7 : index
    %c0_105 = arith.constant 0 : index
    %145 = vector.load %arg2[%c7, %c0_105] : memref<81x32xf32, #tpu.memory_space<vmem>>, vector<1x32xf32>
    %146 = vector.broadcast %145 : vector<1x32xf32> to vector<16x32xf32>
    %147 = arith.mulf %146, %144 : vector<16x32xf32>
    %148 = arith.addf %134, %147 : vector<16x32xf32>
    %c34 = arith.constant 34 : index
    %c0_106 = arith.constant 0 : index
    %149 = vector.load %arg2[%c34, %c0_106] : memref<81x32xf32, #tpu.memory_space<vmem>>, vector<1x32xf32>
    %150 = vector.broadcast %149 : vector<1x32xf32> to vector<16x32xf32>
    %151 = arith.mulf %150, %144 : vector<16x32xf32>
    %152 = arith.addf %138, %151 : vector<16x32xf32>
    %c61 = arith.constant 61 : index
    %c0_107 = arith.constant 0 : index
    %153 = vector.load %arg2[%c61, %c0_107] : memref<81x32xf32, #tpu.memory_space<vmem>>, vector<1x32xf32>
    %154 = vector.broadcast %153 : vector<1x32xf32> to vector<16x32xf32>
    %155 = arith.mulf %154, %144 : vector<16x32xf32>
    %156 = arith.addf %142, %155 : vector<16x32xf32>
    %c0_108 = arith.constant 0 : index
    %c2_109 = arith.constant 2 : index
    %c2_110 = arith.constant 2 : index
    %157 = vector.load %arg5[%c0_108, %c2_109, %c2_110] : memref<3x18x34xf32, #tpu.memory_space<vmem>>, vector<1x16x32xf32>
    %158 = vector.shape_cast %157 : vector<1x16x32xf32> to vector<16x32xf32>
    %c8 = arith.constant 8 : index
    %c0_111 = arith.constant 0 : index
    %159 = vector.load %arg2[%c8, %c0_111] : memref<81x32xf32, #tpu.memory_space<vmem>>, vector<1x32xf32>
    %160 = vector.broadcast %159 : vector<1x32xf32> to vector<16x32xf32>
    %161 = arith.mulf %160, %158 : vector<16x32xf32>
    %162 = arith.addf %148, %161 : vector<16x32xf32>
    %c35 = arith.constant 35 : index
    %c0_112 = arith.constant 0 : index
    %163 = vector.load %arg2[%c35, %c0_112] : memref<81x32xf32, #tpu.memory_space<vmem>>, vector<1x32xf32>
    %164 = vector.broadcast %163 : vector<1x32xf32> to vector<16x32xf32>
    %165 = arith.mulf %164, %158 : vector<16x32xf32>
    %166 = arith.addf %152, %165 : vector<16x32xf32>
    %c62 = arith.constant 62 : index
    %c0_113 = arith.constant 0 : index
    %167 = vector.load %arg2[%c62, %c0_113] : memref<81x32xf32, #tpu.memory_space<vmem>>, vector<1x32xf32>
    %168 = vector.broadcast %167 : vector<1x32xf32> to vector<16x32xf32>
    %169 = arith.mulf %168, %158 : vector<16x32xf32>
    %170 = arith.addf %156, %169 : vector<16x32xf32>
    %c1_114 = arith.constant 1 : index
    %c0_115 = arith.constant 0 : index
    %c0_116 = arith.constant 0 : index
    %171 = vector.load %arg5[%c1_114, %c0_115, %c0_116] : memref<3x18x34xf32, #tpu.memory_space<vmem>>, vector<1x16x32xf32>
    %172 = vector.shape_cast %171 : vector<1x16x32xf32> to vector<16x32xf32>
    %c9 = arith.constant 9 : index
    %c0_117 = arith.constant 0 : index
    %173 = vector.load %arg2[%c9, %c0_117] : memref<81x32xf32, #tpu.memory_space<vmem>>, vector<1x32xf32>
    %174 = vector.broadcast %173 : vector<1x32xf32> to vector<16x32xf32>
    %175 = arith.mulf %174, %172 : vector<16x32xf32>
    %176 = arith.addf %162, %175 : vector<16x32xf32>
    %c36 = arith.constant 36 : index
    %c0_118 = arith.constant 0 : index
    %177 = vector.load %arg2[%c36, %c0_118] : memref<81x32xf32, #tpu.memory_space<vmem>>, vector<1x32xf32>
    %178 = vector.broadcast %177 : vector<1x32xf32> to vector<16x32xf32>
    %179 = arith.mulf %178, %172 : vector<16x32xf32>
    %180 = arith.addf %166, %179 : vector<16x32xf32>
    %c63 = arith.constant 63 : index
    %c0_119 = arith.constant 0 : index
    %181 = vector.load %arg2[%c63, %c0_119] : memref<81x32xf32, #tpu.memory_space<vmem>>, vector<1x32xf32>
    %182 = vector.broadcast %181 : vector<1x32xf32> to vector<16x32xf32>
    %183 = arith.mulf %182, %172 : vector<16x32xf32>
    %184 = arith.addf %170, %183 : vector<16x32xf32>
    %c1_120 = arith.constant 1 : index
    %c0_121 = arith.constant 0 : index
    %c1_122 = arith.constant 1 : index
    %185 = vector.load %arg5[%c1_120, %c0_121, %c1_122] : memref<3x18x34xf32, #tpu.memory_space<vmem>>, vector<1x16x32xf32>
    %186 = vector.shape_cast %185 : vector<1x16x32xf32> to vector<16x32xf32>
    %c10 = arith.constant 10 : index
    %c0_123 = arith.constant 0 : index
    %187 = vector.load %arg2[%c10, %c0_123] : memref<81x32xf32, #tpu.memory_space<vmem>>, vector<1x32xf32>
    %188 = vector.broadcast %187 : vector<1x32xf32> to vector<16x32xf32>
    %189 = arith.mulf %188, %186 : vector<16x32xf32>
    %190 = arith.addf %176, %189 : vector<16x32xf32>
    %c37 = arith.constant 37 : index
    %c0_124 = arith.constant 0 : index
    %191 = vector.load %arg2[%c37, %c0_124] : memref<81x32xf32, #tpu.memory_space<vmem>>, vector<1x32xf32>
    %192 = vector.broadcast %191 : vector<1x32xf32> to vector<16x32xf32>
    %193 = arith.mulf %192, %186 : vector<16x32xf32>
    %194 = arith.addf %180, %193 : vector<16x32xf32>
    %c64 = arith.constant 64 : index
    %c0_125 = arith.constant 0 : index
    %195 = vector.load %arg2[%c64, %c0_125] : memref<81x32xf32, #tpu.memory_space<vmem>>, vector<1x32xf32>
    %196 = vector.broadcast %195 : vector<1x32xf32> to vector<16x32xf32>
    %197 = arith.mulf %196, %186 : vector<16x32xf32>
    %198 = arith.addf %184, %197 : vector<16x32xf32>
    %c1_126 = arith.constant 1 : index
    %c0_127 = arith.constant 0 : index
    %c2_128 = arith.constant 2 : index
    %199 = vector.load %arg5[%c1_126, %c0_127, %c2_128] : memref<3x18x34xf32, #tpu.memory_space<vmem>>, vector<1x16x32xf32>
    %200 = vector.shape_cast %199 : vector<1x16x32xf32> to vector<16x32xf32>
    %c11 = arith.constant 11 : index
    %c0_129 = arith.constant 0 : index
    %201 = vector.load %arg2[%c11, %c0_129] : memref<81x32xf32, #tpu.memory_space<vmem>>, vector<1x32xf32>
    %202 = vector.broadcast %201 : vector<1x32xf32> to vector<16x32xf32>
    %203 = arith.mulf %202, %200 : vector<16x32xf32>
    %204 = arith.addf %190, %203 : vector<16x32xf32>
    %c38 = arith.constant 38 : index
    %c0_130 = arith.constant 0 : index
    %205 = vector.load %arg2[%c38, %c0_130] : memref<81x32xf32, #tpu.memory_space<vmem>>, vector<1x32xf32>
    %206 = vector.broadcast %205 : vector<1x32xf32> to vector<16x32xf32>
    %207 = arith.mulf %206, %200 : vector<16x32xf32>
    %208 = arith.addf %194, %207 : vector<16x32xf32>
    %c65 = arith.constant 65 : index
    %c0_131 = arith.constant 0 : index
    %209 = vector.load %arg2[%c65, %c0_131] : memref<81x32xf32, #tpu.memory_space<vmem>>, vector<1x32xf32>
    %210 = vector.broadcast %209 : vector<1x32xf32> to vector<16x32xf32>
    %211 = arith.mulf %210, %200 : vector<16x32xf32>
    %212 = arith.addf %198, %211 : vector<16x32xf32>
    %c1_132 = arith.constant 1 : index
    %c1_133 = arith.constant 1 : index
    %c0_134 = arith.constant 0 : index
    %213 = vector.load %arg5[%c1_132, %c1_133, %c0_134] : memref<3x18x34xf32, #tpu.memory_space<vmem>>, vector<1x16x32xf32>
    %214 = vector.shape_cast %213 : vector<1x16x32xf32> to vector<16x32xf32>
    %c12 = arith.constant 12 : index
    %c0_135 = arith.constant 0 : index
    %215 = vector.load %arg2[%c12, %c0_135] : memref<81x32xf32, #tpu.memory_space<vmem>>, vector<1x32xf32>
    %216 = vector.broadcast %215 : vector<1x32xf32> to vector<16x32xf32>
    %217 = arith.mulf %216, %214 : vector<16x32xf32>
    %218 = arith.addf %204, %217 : vector<16x32xf32>
    %c39 = arith.constant 39 : index
    %c0_136 = arith.constant 0 : index
    %219 = vector.load %arg2[%c39, %c0_136] : memref<81x32xf32, #tpu.memory_space<vmem>>, vector<1x32xf32>
    %220 = vector.broadcast %219 : vector<1x32xf32> to vector<16x32xf32>
    %221 = arith.mulf %220, %214 : vector<16x32xf32>
    %222 = arith.addf %208, %221 : vector<16x32xf32>
    %c66 = arith.constant 66 : index
    %c0_137 = arith.constant 0 : index
    %223 = vector.load %arg2[%c66, %c0_137] : memref<81x32xf32, #tpu.memory_space<vmem>>, vector<1x32xf32>
    %224 = vector.broadcast %223 : vector<1x32xf32> to vector<16x32xf32>
    %225 = arith.mulf %224, %214 : vector<16x32xf32>
    %226 = arith.addf %212, %225 : vector<16x32xf32>
    %c1_138 = arith.constant 1 : index
    %c1_139 = arith.constant 1 : index
    %c1_140 = arith.constant 1 : index
    %227 = vector.load %arg5[%c1_138, %c1_139, %c1_140] : memref<3x18x34xf32, #tpu.memory_space<vmem>>, vector<1x16x32xf32>
    %228 = vector.shape_cast %227 : vector<1x16x32xf32> to vector<16x32xf32>
    %c13 = arith.constant 13 : index
    %c0_141 = arith.constant 0 : index
    %229 = vector.load %arg2[%c13, %c0_141] : memref<81x32xf32, #tpu.memory_space<vmem>>, vector<1x32xf32>
    %230 = vector.broadcast %229 : vector<1x32xf32> to vector<16x32xf32>
    %231 = arith.mulf %230, %228 : vector<16x32xf32>
    %232 = arith.addf %218, %231 : vector<16x32xf32>
    %c40 = arith.constant 40 : index
    %c0_142 = arith.constant 0 : index
    %233 = vector.load %arg2[%c40, %c0_142] : memref<81x32xf32, #tpu.memory_space<vmem>>, vector<1x32xf32>
    %234 = vector.broadcast %233 : vector<1x32xf32> to vector<16x32xf32>
    %235 = arith.mulf %234, %228 : vector<16x32xf32>
    %236 = arith.addf %222, %235 : vector<16x32xf32>
    %c67 = arith.constant 67 : index
    %c0_143 = arith.constant 0 : index
    %237 = vector.load %arg2[%c67, %c0_143] : memref<81x32xf32, #tpu.memory_space<vmem>>, vector<1x32xf32>
    %238 = vector.broadcast %237 : vector<1x32xf32> to vector<16x32xf32>
    %239 = arith.mulf %238, %228 : vector<16x32xf32>
    %240 = arith.addf %226, %239 : vector<16x32xf32>
    %c1_144 = arith.constant 1 : index
    %c1_145 = arith.constant 1 : index
    %c2_146 = arith.constant 2 : index
    %241 = vector.load %arg5[%c1_144, %c1_145, %c2_146] : memref<3x18x34xf32, #tpu.memory_space<vmem>>, vector<1x16x32xf32>
    %242 = vector.shape_cast %241 : vector<1x16x32xf32> to vector<16x32xf32>
    %c14 = arith.constant 14 : index
    %c0_147 = arith.constant 0 : index
    %243 = vector.load %arg2[%c14, %c0_147] : memref<81x32xf32, #tpu.memory_space<vmem>>, vector<1x32xf32>
    %244 = vector.broadcast %243 : vector<1x32xf32> to vector<16x32xf32>
    %245 = arith.mulf %244, %242 : vector<16x32xf32>
    %246 = arith.addf %232, %245 : vector<16x32xf32>
    %c41 = arith.constant 41 : index
    %c0_148 = arith.constant 0 : index
    %247 = vector.load %arg2[%c41, %c0_148] : memref<81x32xf32, #tpu.memory_space<vmem>>, vector<1x32xf32>
    %248 = vector.broadcast %247 : vector<1x32xf32> to vector<16x32xf32>
    %249 = arith.mulf %248, %242 : vector<16x32xf32>
    %250 = arith.addf %236, %249 : vector<16x32xf32>
    %c68 = arith.constant 68 : index
    %c0_149 = arith.constant 0 : index
    %251 = vector.load %arg2[%c68, %c0_149] : memref<81x32xf32, #tpu.memory_space<vmem>>, vector<1x32xf32>
    %252 = vector.broadcast %251 : vector<1x32xf32> to vector<16x32xf32>
    %253 = arith.mulf %252, %242 : vector<16x32xf32>
    %254 = arith.addf %240, %253 : vector<16x32xf32>
    %c1_150 = arith.constant 1 : index
    %c2_151 = arith.constant 2 : index
    %c0_152 = arith.constant 0 : index
    %255 = vector.load %arg5[%c1_150, %c2_151, %c0_152] : memref<3x18x34xf32, #tpu.memory_space<vmem>>, vector<1x16x32xf32>
    %256 = vector.shape_cast %255 : vector<1x16x32xf32> to vector<16x32xf32>
    %c15 = arith.constant 15 : index
    %c0_153 = arith.constant 0 : index
    %257 = vector.load %arg2[%c15, %c0_153] : memref<81x32xf32, #tpu.memory_space<vmem>>, vector<1x32xf32>
    %258 = vector.broadcast %257 : vector<1x32xf32> to vector<16x32xf32>
    %259 = arith.mulf %258, %256 : vector<16x32xf32>
    %260 = arith.addf %246, %259 : vector<16x32xf32>
    %c42 = arith.constant 42 : index
    %c0_154 = arith.constant 0 : index
    %261 = vector.load %arg2[%c42, %c0_154] : memref<81x32xf32, #tpu.memory_space<vmem>>, vector<1x32xf32>
    %262 = vector.broadcast %261 : vector<1x32xf32> to vector<16x32xf32>
    %263 = arith.mulf %262, %256 : vector<16x32xf32>
    %264 = arith.addf %250, %263 : vector<16x32xf32>
    %c69 = arith.constant 69 : index
    %c0_155 = arith.constant 0 : index
    %265 = vector.load %arg2[%c69, %c0_155] : memref<81x32xf32, #tpu.memory_space<vmem>>, vector<1x32xf32>
    %266 = vector.broadcast %265 : vector<1x32xf32> to vector<16x32xf32>
    %267 = arith.mulf %266, %256 : vector<16x32xf32>
    %268 = arith.addf %254, %267 : vector<16x32xf32>
    %c1_156 = arith.constant 1 : index
    %c2_157 = arith.constant 2 : index
    %c1_158 = arith.constant 1 : index
    %269 = vector.load %arg5[%c1_156, %c2_157, %c1_158] : memref<3x18x34xf32, #tpu.memory_space<vmem>>, vector<1x16x32xf32>
    %270 = vector.shape_cast %269 : vector<1x16x32xf32> to vector<16x32xf32>
    %c16 = arith.constant 16 : index
    %c0_159 = arith.constant 0 : index
    %271 = vector.load %arg2[%c16, %c0_159] : memref<81x32xf32, #tpu.memory_space<vmem>>, vector<1x32xf32>
    %272 = vector.broadcast %271 : vector<1x32xf32> to vector<16x32xf32>
    %273 = arith.mulf %272, %270 : vector<16x32xf32>
    %274 = arith.addf %260, %273 : vector<16x32xf32>
    %c43 = arith.constant 43 : index
    %c0_160 = arith.constant 0 : index
    %275 = vector.load %arg2[%c43, %c0_160] : memref<81x32xf32, #tpu.memory_space<vmem>>, vector<1x32xf32>
    %276 = vector.broadcast %275 : vector<1x32xf32> to vector<16x32xf32>
    %277 = arith.mulf %276, %270 : vector<16x32xf32>
    %278 = arith.addf %264, %277 : vector<16x32xf32>
    %c70 = arith.constant 70 : index
    %c0_161 = arith.constant 0 : index
    %279 = vector.load %arg2[%c70, %c0_161] : memref<81x32xf32, #tpu.memory_space<vmem>>, vector<1x32xf32>
    %280 = vector.broadcast %279 : vector<1x32xf32> to vector<16x32xf32>
    %281 = arith.mulf %280, %270 : vector<16x32xf32>
    %282 = arith.addf %268, %281 : vector<16x32xf32>
    %c1_162 = arith.constant 1 : index
    %c2_163 = arith.constant 2 : index
    %c2_164 = arith.constant 2 : index
    %283 = vector.load %arg5[%c1_162, %c2_163, %c2_164] : memref<3x18x34xf32, #tpu.memory_space<vmem>>, vector<1x16x32xf32>
    %284 = vector.shape_cast %283 : vector<1x16x32xf32> to vector<16x32xf32>
    %c17_165 = arith.constant 17 : index
    %c0_166 = arith.constant 0 : index
    %285 = vector.load %arg2[%c17_165, %c0_166] : memref<81x32xf32, #tpu.memory_space<vmem>>, vector<1x32xf32>
    %286 = vector.broadcast %285 : vector<1x32xf32> to vector<16x32xf32>
    %287 = arith.mulf %286, %284 : vector<16x32xf32>
    %288 = arith.addf %274, %287 : vector<16x32xf32>
    %c44 = arith.constant 44 : index
    %c0_167 = arith.constant 0 : index
    %289 = vector.load %arg2[%c44, %c0_167] : memref<81x32xf32, #tpu.memory_space<vmem>>, vector<1x32xf32>
    %290 = vector.broadcast %289 : vector<1x32xf32> to vector<16x32xf32>
    %291 = arith.mulf %290, %284 : vector<16x32xf32>
    %292 = arith.addf %278, %291 : vector<16x32xf32>
    %c71 = arith.constant 71 : index
    %c0_168 = arith.constant 0 : index
    %293 = vector.load %arg2[%c71, %c0_168] : memref<81x32xf32, #tpu.memory_space<vmem>>, vector<1x32xf32>
    %294 = vector.broadcast %293 : vector<1x32xf32> to vector<16x32xf32>
    %295 = arith.mulf %294, %284 : vector<16x32xf32>
    %296 = arith.addf %282, %295 : vector<16x32xf32>
    %c2_169 = arith.constant 2 : index
    %c0_170 = arith.constant 0 : index
    %c0_171 = arith.constant 0 : index
    %297 = vector.load %arg5[%c2_169, %c0_170, %c0_171] : memref<3x18x34xf32, #tpu.memory_space<vmem>>, vector<1x16x32xf32>
    %298 = vector.shape_cast %297 : vector<1x16x32xf32> to vector<16x32xf32>
    %c18 = arith.constant 18 : index
    %c0_172 = arith.constant 0 : index
    %299 = vector.load %arg2[%c18, %c0_172] : memref<81x32xf32, #tpu.memory_space<vmem>>, vector<1x32xf32>
    %300 = vector.broadcast %299 : vector<1x32xf32> to vector<16x32xf32>
    %301 = arith.mulf %300, %298 : vector<16x32xf32>
    %302 = arith.addf %288, %301 : vector<16x32xf32>
    %c45 = arith.constant 45 : index
    %c0_173 = arith.constant 0 : index
    %303 = vector.load %arg2[%c45, %c0_173] : memref<81x32xf32, #tpu.memory_space<vmem>>, vector<1x32xf32>
    %304 = vector.broadcast %303 : vector<1x32xf32> to vector<16x32xf32>
    %305 = arith.mulf %304, %298 : vector<16x32xf32>
    %306 = arith.addf %292, %305 : vector<16x32xf32>
    %c72 = arith.constant 72 : index
    %c0_174 = arith.constant 0 : index
    %307 = vector.load %arg2[%c72, %c0_174] : memref<81x32xf32, #tpu.memory_space<vmem>>, vector<1x32xf32>
    %308 = vector.broadcast %307 : vector<1x32xf32> to vector<16x32xf32>
    %309 = arith.mulf %308, %298 : vector<16x32xf32>
    %310 = arith.addf %296, %309 : vector<16x32xf32>
    %c2_175 = arith.constant 2 : index
    %c0_176 = arith.constant 0 : index
    %c1_177 = arith.constant 1 : index
    %311 = vector.load %arg5[%c2_175, %c0_176, %c1_177] : memref<3x18x34xf32, #tpu.memory_space<vmem>>, vector<1x16x32xf32>
    %312 = vector.shape_cast %311 : vector<1x16x32xf32> to vector<16x32xf32>
    %c19 = arith.constant 19 : index
    %c0_178 = arith.constant 0 : index
    %313 = vector.load %arg2[%c19, %c0_178] : memref<81x32xf32, #tpu.memory_space<vmem>>, vector<1x32xf32>
    %314 = vector.broadcast %313 : vector<1x32xf32> to vector<16x32xf32>
    %315 = arith.mulf %314, %312 : vector<16x32xf32>
    %316 = arith.addf %302, %315 : vector<16x32xf32>
    %c46 = arith.constant 46 : index
    %c0_179 = arith.constant 0 : index
    %317 = vector.load %arg2[%c46, %c0_179] : memref<81x32xf32, #tpu.memory_space<vmem>>, vector<1x32xf32>
    %318 = vector.broadcast %317 : vector<1x32xf32> to vector<16x32xf32>
    %319 = arith.mulf %318, %312 : vector<16x32xf32>
    %320 = arith.addf %306, %319 : vector<16x32xf32>
    %c73 = arith.constant 73 : index
    %c0_180 = arith.constant 0 : index
    %321 = vector.load %arg2[%c73, %c0_180] : memref<81x32xf32, #tpu.memory_space<vmem>>, vector<1x32xf32>
    %322 = vector.broadcast %321 : vector<1x32xf32> to vector<16x32xf32>
    %323 = arith.mulf %322, %312 : vector<16x32xf32>
    %324 = arith.addf %310, %323 : vector<16x32xf32>
    %c2_181 = arith.constant 2 : index
    %c0_182 = arith.constant 0 : index
    %c2_183 = arith.constant 2 : index
    %325 = vector.load %arg5[%c2_181, %c0_182, %c2_183] : memref<3x18x34xf32, #tpu.memory_space<vmem>>, vector<1x16x32xf32>
    %326 = vector.shape_cast %325 : vector<1x16x32xf32> to vector<16x32xf32>
    %c20 = arith.constant 20 : index
    %c0_184 = arith.constant 0 : index
    %327 = vector.load %arg2[%c20, %c0_184] : memref<81x32xf32, #tpu.memory_space<vmem>>, vector<1x32xf32>
    %328 = vector.broadcast %327 : vector<1x32xf32> to vector<16x32xf32>
    %329 = arith.mulf %328, %326 : vector<16x32xf32>
    %330 = arith.addf %316, %329 : vector<16x32xf32>
    %c47 = arith.constant 47 : index
    %c0_185 = arith.constant 0 : index
    %331 = vector.load %arg2[%c47, %c0_185] : memref<81x32xf32, #tpu.memory_space<vmem>>, vector<1x32xf32>
    %332 = vector.broadcast %331 : vector<1x32xf32> to vector<16x32xf32>
    %333 = arith.mulf %332, %326 : vector<16x32xf32>
    %334 = arith.addf %320, %333 : vector<16x32xf32>
    %c74 = arith.constant 74 : index
    %c0_186 = arith.constant 0 : index
    %335 = vector.load %arg2[%c74, %c0_186] : memref<81x32xf32, #tpu.memory_space<vmem>>, vector<1x32xf32>
    %336 = vector.broadcast %335 : vector<1x32xf32> to vector<16x32xf32>
    %337 = arith.mulf %336, %326 : vector<16x32xf32>
    %338 = arith.addf %324, %337 : vector<16x32xf32>
    %c2_187 = arith.constant 2 : index
    %c1_188 = arith.constant 1 : index
    %c0_189 = arith.constant 0 : index
    %339 = vector.load %arg5[%c2_187, %c1_188, %c0_189] : memref<3x18x34xf32, #tpu.memory_space<vmem>>, vector<1x16x32xf32>
    %340 = vector.shape_cast %339 : vector<1x16x32xf32> to vector<16x32xf32>
    %c21 = arith.constant 21 : index
    %c0_190 = arith.constant 0 : index
    %341 = vector.load %arg2[%c21, %c0_190] : memref<81x32xf32, #tpu.memory_space<vmem>>, vector<1x32xf32>
    %342 = vector.broadcast %341 : vector<1x32xf32> to vector<16x32xf32>
    %343 = arith.mulf %342, %340 : vector<16x32xf32>
    %344 = arith.addf %330, %343 : vector<16x32xf32>
    %c48 = arith.constant 48 : index
    %c0_191 = arith.constant 0 : index
    %345 = vector.load %arg2[%c48, %c0_191] : memref<81x32xf32, #tpu.memory_space<vmem>>, vector<1x32xf32>
    %346 = vector.broadcast %345 : vector<1x32xf32> to vector<16x32xf32>
    %347 = arith.mulf %346, %340 : vector<16x32xf32>
    %348 = arith.addf %334, %347 : vector<16x32xf32>
    %c75 = arith.constant 75 : index
    %c0_192 = arith.constant 0 : index
    %349 = vector.load %arg2[%c75, %c0_192] : memref<81x32xf32, #tpu.memory_space<vmem>>, vector<1x32xf32>
    %350 = vector.broadcast %349 : vector<1x32xf32> to vector<16x32xf32>
    %351 = arith.mulf %350, %340 : vector<16x32xf32>
    %352 = arith.addf %338, %351 : vector<16x32xf32>
    %c2_193 = arith.constant 2 : index
    %c1_194 = arith.constant 1 : index
    %c1_195 = arith.constant 1 : index
    %353 = vector.load %arg5[%c2_193, %c1_194, %c1_195] : memref<3x18x34xf32, #tpu.memory_space<vmem>>, vector<1x16x32xf32>
    %354 = vector.shape_cast %353 : vector<1x16x32xf32> to vector<16x32xf32>
    %c22 = arith.constant 22 : index
    %c0_196 = arith.constant 0 : index
    %355 = vector.load %arg2[%c22, %c0_196] : memref<81x32xf32, #tpu.memory_space<vmem>>, vector<1x32xf32>
    %356 = vector.broadcast %355 : vector<1x32xf32> to vector<16x32xf32>
    %357 = arith.mulf %356, %354 : vector<16x32xf32>
    %358 = arith.addf %344, %357 : vector<16x32xf32>
    %c49 = arith.constant 49 : index
    %c0_197 = arith.constant 0 : index
    %359 = vector.load %arg2[%c49, %c0_197] : memref<81x32xf32, #tpu.memory_space<vmem>>, vector<1x32xf32>
    %360 = vector.broadcast %359 : vector<1x32xf32> to vector<16x32xf32>
    %361 = arith.mulf %360, %354 : vector<16x32xf32>
    %362 = arith.addf %348, %361 : vector<16x32xf32>
    %c76 = arith.constant 76 : index
    %c0_198 = arith.constant 0 : index
    %363 = vector.load %arg2[%c76, %c0_198] : memref<81x32xf32, #tpu.memory_space<vmem>>, vector<1x32xf32>
    %364 = vector.broadcast %363 : vector<1x32xf32> to vector<16x32xf32>
    %365 = arith.mulf %364, %354 : vector<16x32xf32>
    %366 = arith.addf %352, %365 : vector<16x32xf32>
    %c2_199 = arith.constant 2 : index
    %c1_200 = arith.constant 1 : index
    %c2_201 = arith.constant 2 : index
    %367 = vector.load %arg5[%c2_199, %c1_200, %c2_201] : memref<3x18x34xf32, #tpu.memory_space<vmem>>, vector<1x16x32xf32>
    %368 = vector.shape_cast %367 : vector<1x16x32xf32> to vector<16x32xf32>
    %c23 = arith.constant 23 : index
    %c0_202 = arith.constant 0 : index
    %369 = vector.load %arg2[%c23, %c0_202] : memref<81x32xf32, #tpu.memory_space<vmem>>, vector<1x32xf32>
    %370 = vector.broadcast %369 : vector<1x32xf32> to vector<16x32xf32>
    %371 = arith.mulf %370, %368 : vector<16x32xf32>
    %372 = arith.addf %358, %371 : vector<16x32xf32>
    %c50 = arith.constant 50 : index
    %c0_203 = arith.constant 0 : index
    %373 = vector.load %arg2[%c50, %c0_203] : memref<81x32xf32, #tpu.memory_space<vmem>>, vector<1x32xf32>
    %374 = vector.broadcast %373 : vector<1x32xf32> to vector<16x32xf32>
    %375 = arith.mulf %374, %368 : vector<16x32xf32>
    %376 = arith.addf %362, %375 : vector<16x32xf32>
    %c77 = arith.constant 77 : index
    %c0_204 = arith.constant 0 : index
    %377 = vector.load %arg2[%c77, %c0_204] : memref<81x32xf32, #tpu.memory_space<vmem>>, vector<1x32xf32>
    %378 = vector.broadcast %377 : vector<1x32xf32> to vector<16x32xf32>
    %379 = arith.mulf %378, %368 : vector<16x32xf32>
    %380 = arith.addf %366, %379 : vector<16x32xf32>
    %c2_205 = arith.constant 2 : index
    %c2_206 = arith.constant 2 : index
    %c0_207 = arith.constant 0 : index
    %381 = vector.load %arg5[%c2_205, %c2_206, %c0_207] : memref<3x18x34xf32, #tpu.memory_space<vmem>>, vector<1x16x32xf32>
    %382 = vector.shape_cast %381 : vector<1x16x32xf32> to vector<16x32xf32>
    %c24 = arith.constant 24 : index
    %c0_208 = arith.constant 0 : index
    %383 = vector.load %arg2[%c24, %c0_208] : memref<81x32xf32, #tpu.memory_space<vmem>>, vector<1x32xf32>
    %384 = vector.broadcast %383 : vector<1x32xf32> to vector<16x32xf32>
    %385 = arith.mulf %384, %382 : vector<16x32xf32>
    %386 = arith.addf %372, %385 : vector<16x32xf32>
    %c51 = arith.constant 51 : index
    %c0_209 = arith.constant 0 : index
    %387 = vector.load %arg2[%c51, %c0_209] : memref<81x32xf32, #tpu.memory_space<vmem>>, vector<1x32xf32>
    %388 = vector.broadcast %387 : vector<1x32xf32> to vector<16x32xf32>
    %389 = arith.mulf %388, %382 : vector<16x32xf32>
    %390 = arith.addf %376, %389 : vector<16x32xf32>
    %c78 = arith.constant 78 : index
    %c0_210 = arith.constant 0 : index
    %391 = vector.load %arg2[%c78, %c0_210] : memref<81x32xf32, #tpu.memory_space<vmem>>, vector<1x32xf32>
    %392 = vector.broadcast %391 : vector<1x32xf32> to vector<16x32xf32>
    %393 = arith.mulf %392, %382 : vector<16x32xf32>
    %394 = arith.addf %380, %393 : vector<16x32xf32>
    %c2_211 = arith.constant 2 : index
    %c2_212 = arith.constant 2 : index
    %c1_213 = arith.constant 1 : index
    %395 = vector.load %arg5[%c2_211, %c2_212, %c1_213] : memref<3x18x34xf32, #tpu.memory_space<vmem>>, vector<1x16x32xf32>
    %396 = vector.shape_cast %395 : vector<1x16x32xf32> to vector<16x32xf32>
    %c25 = arith.constant 25 : index
    %c0_214 = arith.constant 0 : index
    %397 = vector.load %arg2[%c25, %c0_214] : memref<81x32xf32, #tpu.memory_space<vmem>>, vector<1x32xf32>
    %398 = vector.broadcast %397 : vector<1x32xf32> to vector<16x32xf32>
    %399 = arith.mulf %398, %396 : vector<16x32xf32>
    %400 = arith.addf %386, %399 : vector<16x32xf32>
    %c52 = arith.constant 52 : index
    %c0_215 = arith.constant 0 : index
    %401 = vector.load %arg2[%c52, %c0_215] : memref<81x32xf32, #tpu.memory_space<vmem>>, vector<1x32xf32>
    %402 = vector.broadcast %401 : vector<1x32xf32> to vector<16x32xf32>
    %403 = arith.mulf %402, %396 : vector<16x32xf32>
    %404 = arith.addf %390, %403 : vector<16x32xf32>
    %c79 = arith.constant 79 : index
    %c0_216 = arith.constant 0 : index
    %405 = vector.load %arg2[%c79, %c0_216] : memref<81x32xf32, #tpu.memory_space<vmem>>, vector<1x32xf32>
    %406 = vector.broadcast %405 : vector<1x32xf32> to vector<16x32xf32>
    %407 = arith.mulf %406, %396 : vector<16x32xf32>
    %408 = arith.addf %394, %407 : vector<16x32xf32>
    %c2_217 = arith.constant 2 : index
    %c2_218 = arith.constant 2 : index
    %c2_219 = arith.constant 2 : index
    %409 = vector.load %arg5[%c2_217, %c2_218, %c2_219] : memref<3x18x34xf32, #tpu.memory_space<vmem>>, vector<1x16x32xf32>
    %410 = vector.shape_cast %409 : vector<1x16x32xf32> to vector<16x32xf32>
    %c26 = arith.constant 26 : index
    %c0_220 = arith.constant 0 : index
    %411 = vector.load %arg2[%c26, %c0_220] : memref<81x32xf32, #tpu.memory_space<vmem>>, vector<1x32xf32>
    %412 = vector.broadcast %411 : vector<1x32xf32> to vector<16x32xf32>
    %413 = arith.mulf %412, %410 : vector<16x32xf32>
    %414 = arith.addf %400, %413 : vector<16x32xf32>
    %c53 = arith.constant 53 : index
    %c0_221 = arith.constant 0 : index
    %415 = vector.load %arg2[%c53, %c0_221] : memref<81x32xf32, #tpu.memory_space<vmem>>, vector<1x32xf32>
    %416 = vector.broadcast %415 : vector<1x32xf32> to vector<16x32xf32>
    %417 = arith.mulf %416, %410 : vector<16x32xf32>
    %418 = arith.addf %404, %417 : vector<16x32xf32>
    %c80 = arith.constant 80 : index
    %c0_222 = arith.constant 0 : index
    %419 = vector.load %arg2[%c80, %c0_222] : memref<81x32xf32, #tpu.memory_space<vmem>>, vector<1x32xf32>
    %420 = vector.broadcast %419 : vector<1x32xf32> to vector<16x32xf32>
    %421 = arith.mulf %420, %410 : vector<16x32xf32>
    %422 = arith.addf %408, %421 : vector<16x32xf32>
    %c0_223 = arith.constant 0 : index
    %c0_224 = arith.constant 0 : index
    %c0_225 = arith.constant 0 : index
    %423 = vector.load %arg4[%c0_223, %c0_224, %c0_225] : memref<3x16x32xf32, #tpu.memory_space<vmem>>, vector<1x16x32xf32>
    %424 = vector.shape_cast %423 : vector<1x16x32xf32> to vector<16x32xf32>
    %425 = vector.shape_cast %414 : vector<16x32xf32> to vector<1x16x32xf32>
    tpu.vector_store %arg4[%c0_223, %c0_224, %c0_225], %425 {strides = array<i32>} : memref<3x16x32xf32, #tpu.memory_space<vmem>>, vector<1x16x32xf32>,
    %c1_226 = arith.constant 1 : index
    %c0_227 = arith.constant 0 : index
    %c0_228 = arith.constant 0 : index
    %426 = vector.load %arg4[%c1_226, %c0_227, %c0_228] : memref<3x16x32xf32, #tpu.memory_space<vmem>>, vector<1x16x32xf32>
    %427 = vector.shape_cast %426 : vector<1x16x32xf32> to vector<16x32xf32>
    %428 = vector.shape_cast %418 : vector<16x32xf32> to vector<1x16x32xf32>
    tpu.vector_store %arg4[%c1_226, %c0_227, %c0_228], %428 {strides = array<i32>} : memref<3x16x32xf32, #tpu.memory_space<vmem>>, vector<1x16x32xf32>,
    %c2_229 = arith.constant 2 : index
    %c0_230 = arith.constant 0 : index
    %c0_231 = arith.constant 0 : index
    %429 = vector.load %arg4[%c2_229, %c0_230, %c0_231] : memref<3x16x32xf32, #tpu.memory_space<vmem>>, vector<1x16x32xf32>
    %430 = vector.shape_cast %429 : vector<1x16x32xf32> to vector<16x32xf32>
    %431 = vector.shape_cast %422 : vector<16x32xf32> to vector<1x16x32xf32>
    tpu.vector_store %arg4[%c2_229, %c0_230, %c0_231], %431 {strides = array<i32>} : memref<3x16x32xf32, #tpu.memory_space<vmem>>, vector<1x16x32xf32>,
    return
  }
  func.func @transform_0(%arg0: i32) -> (i32, i32, i32, i32) {
    %c0_i32 = arith.constant 0 : i32
    %c0_i32_0 = arith.constant 0 : i32
    %c0_i32_1 = arith.constant 0 : i32
    %c0_i32_2 = arith.constant 0 : i32
    return %arg0, %c0_i32, %c0_i32_0, %c0_i32_1 : i32, i32, i32, i32
  }
  func.func @transform_1(%arg0: i32) -> (i32, i32) {
    %c0_i32 = arith.constant 0 : i32
    %c0_i32_0 = arith.constant 0 : i32
    return %c0_i32, %arg0 : i32, i32
  }
  func.func @transform_2(%arg0: i32) -> (i32, i32) {
    %c0_i32 = arith.constant 0 : i32
    %c0_i32_0 = arith.constant 0 : i32
    return %c0_i32, %arg0 : i32, i32
  }
  func.func @transform_3(%arg0: i32) -> (i32, i32, i32) {
    %c0_i32 = arith.constant 0 : i32
    %c0_i32_0 = arith.constant 0 : i32
    %c0_i32_1 = arith.constant 0 : i32
    return %c0_i32, %c0_i32_0, %arg0 : i32, i32, i32
  }
}

</mosaic_0001>

<llo_original>
// kernel: random_aug_list_forward.1
$region0: #{random_aug_list_forward.1}
  #allocation0 [shape = 'u32[]', space=smem, size = 0x4, offset = 0x4, fixed_abs, tag = 'smem constant byte address 0x4 - core index']
  #allocation1 [shape = 'u32[72,128]{1,0:T(1,128)}', space=vmem, size = 0x9000, scoped, tag = 'internal scratch']
  #allocation2 [shape = 'f32[3,18,34]{2,1,0:T(8,128)}', space=vmem, size = 0x9000, scoped, tag = 'scratch operand']
  %s0 = inlined_call_operand.vmem [shape: f32[2,3,16,16], index: 0, kind: input, shape index: {}]
  %s1 = inlined_call_operand.vmem [shape: f32[81,32], index: 1, kind: input, shape index: {}]
  %s2 = inlined_call_operand.vmem [shape: f32[3,32], index: 2, kind: input, shape index: {}]
  %s3 = inlined_call_operand.vmem [shape: f32[3,16,32], index: 3, kind: output, shape index: {}]
  %s4 = sld [smem:[#allocation0]]
  $region22: #{random_aug_list_forward.1} parent=0
    _
  %s6 = ssub.s32 1, %s4
  %s7 = scalar_select 0, %s6, %s4
  // Predicated region
  $region2: #{random_aug_list_forward.1} parent=0 // pred_check
    _
  $region3: #{random_aug_list_forward.1} parent=0 // pred_check_branch
    %9 = sbr.rel (0) target = $region5
  $region4: #{random_aug_list_forward.1} parent=0 // pred_region
    _
  $region5: #{random_aug_list_forward.1} parent=0 // pred_fallthru
    _
  // Predicated region
  $region6: #{random_aug_list_forward.1} parent=0 // pred_check
    _
  $region7: #{random_aug_list_forward.1} parent=0 // pred_check_branch
    %11 = sbr.rel (0) target = $region9
  $region8: #{random_aug_list_forward.1} parent=0 // pred_region
    _
  $region9: #{random_aug_list_forward.1} parent=0 // pred_fallthru
    _
  // Predicated region
  $region10: #{random_aug_list_forward.1} parent=0 // pred_check
    _
  $region11: #{random_aug_list_forward.1} parent=0 // pred_check_branch
    %13 = sbr.rel (0) target = $region13
  $region12: #{random_aug_list_forward.1} parent=0 // pred_region
    _
  $region13: #{random_aug_list_forward.1} parent=0 // pred_fallthru
    _
  %vm14 = vcmask 270336
  %15 = vst.msk [vmem:[#allocation2] sm:$0x1] %vm14, 0.0
  %16 = vst.msk [vmem:[#allocation2 + $0x18] sm:$0x1] %vm14, 0.0
  %17 = vst.msk [vmem:[#allocation2 + $0x30] sm:$0x1] %vm14, 0.0
  %18 = vst.msk [vmem:[#allocation2 + $0x11] sm:$0x1] %vm14, 0.0
  %19 = vst.msk [vmem:[#allocation2 + $0x29] sm:$0x1] %vm14, 0.0
  %20 = vst.msk [vmem:[#allocation2 + $0x41] sm:$0x1] %vm14, 0.0
  %vm21 = vcmask 7168
  %22 = vst.msk [vmem:[#allocation2] sm:$0xff] %vm21, 0.0
  %23 = vst.msk [vmem:[#allocation2 + $0x8] sm:$0xff] %vm21, 0.0
  %vm24 = vcmask 1024
  %25 = vst.msk [vmem:[#allocation2 + $0x10] sm:$0x3] %vm24, 0.0
  %26 = vst.msk [vmem:[#allocation2 + $0x18] sm:$0xff] %vm21, 0.0
  %27 = vst.msk [vmem:[#allocation2 + $0x20] sm:$0xff] %vm21, 0.0
  %28 = vst.msk [vmem:[#allocation2 + $0x28] sm:$0x3] %vm24, 0.0
  %29 = vst.msk [vmem:[#allocation2 + $0x30] sm:$0xff] %vm21, 0.0
  %30 = vst.msk [vmem:[#allocation2 + $0x38] sm:$0xff] %vm21, 0.0
  %31 = vst.msk [vmem:[#allocation2 + $0x40] sm:$0x3] %vm24, 0.0
  %vm32 = vcmask 277768
  %33 = vst.msk [vmem:[#allocation2] sm:$0xff] %vm32, 0.0
  %34 = vst.msk [vmem:[#allocation2 + $0x8] sm:$0xff] %vm32, 0.0
  %vm35 = vcmask 271624
  %36 = vst.msk [vmem:[#allocation2 + $0x10] sm:$0x3] %vm35, 0.0
  %37 = vst.msk [vmem:[#allocation2 + $0x18] sm:$0xff] %vm32, 0.0
  %38 = vst.msk [vmem:[#allocation2 + $0x20] sm:$0xff] %vm32, 0.0
  %39 = vst.msk [vmem:[#allocation2 + $0x28] sm:$0x3] %vm35, 0.0
  %40 = vst.msk [vmem:[#allocation2 + $0x30] sm:$0xff] %vm32, 0.0
  %41 = vst.msk [vmem:[#allocation2 + $0x38] sm:$0xff] %vm32, 0.0
  %42 = vst.msk [vmem:[#allocation2 + $0x40] sm:$0x3] %vm35, 0.0
  %v43 = vld [vmem:[%s0] sm:$0xff]
  %v44 = vld [vmem:[%s0 + $0x8] sm:$0xff]
  %47 = vrot.lane.b32.xlu0 %v43, 1
  %v48 = vpop.permute.xlu0 %47
  %49 = vrot.lane.b32.xlu0 %v44, 1
  %v50 = vpop.permute.xlu0 %49
  %vm53 = vcmask 138248
  %54 = vst.msk [vmem:[#allocation2 + $0x1] sm:$0xff] %vm53, %v48
  %55 = vst.msk [vmem:[#allocation2 + $0x9] sm:$0xff] %vm53, %v50
  %s56 = scalar_lea.vmem %s0, 16
  %v57 = vld [vmem:[%s56] sm:$0xff]
  %v58 = vld [vmem:[%s56 + $0x8] sm:$0xff]
  %61 = vrot.lane.b32.xlu0 %v57, 1
  %v62 = vpop.permute.xlu0 %61
  %63 = vrot.lane.b32.xlu0 %v58, 1
  %v64 = vpop.permute.xlu0 %63
  %s67 = scalar_lea.vmem [#allocation2], 24
  %68 = vst.msk [vmem:[%s67 + $0x1] sm:$0xff] %vm53, %v62
  %69 = vst.msk [vmem:[%s67 + $0x9] sm:$0xff] %vm53, %v64
  %s70 = scalar_lea.vmem %s0, 32
  %v71 = vld [vmem:[%s70] sm:$0xff]
  %v72 = vld [vmem:[%s70 + $0x8] sm:$0xff]
  %75 = vrot.lane.b32.xlu0 %v71, 1
  %v76 = vpop.permute.xlu0 %75
  %77 = vrot.lane.b32.xlu0 %v72, 1
  %v78 = vpop.permute.xlu0 %77
  %s81 = scalar_lea.vmem [#allocation2], 48
  %82 = vst.msk [vmem:[%s81 + $0x1] sm:$0xff] %vm53, %v76
  %83 = vst.msk [vmem:[%s81 + $0x9] sm:$0xff] %vm53, %v78
  %s84 = scalar_lea.vmem %s0, 48
  %v85 = vld [vmem:[%s84] sm:$0xff]
  %v86 = vld [vmem:[%s84 + $0x8] sm:$0xff]
  %89 = vrot.lane.b32.xlu0 %v85, 17
  %v90 = vpop.permute.xlu0 %89
  %91 = vrot.lane.b32.xlu0 %v86, 17
  %v92 = vpop.permute.xlu0 %91
  %vm95 = vcmask 269448
  %96 = vst.msk [vmem:[#allocation2 + $0x1] sm:$0xff] %vm95, %v90
  %97 = vst.msk [vmem:[#allocation2 + $0x9] sm:$0xff] %vm95, %v92
  %s98 = scalar_lea.vmem %s0, 64
  %v99 = vld [vmem:[%s98] sm:$0xff]
  %v100 = vld [vmem:[%s98 + $0x8] sm:$0xff]
  %103 = vrot.lane.b32.xlu0 %v99, 17
  %v104 = vpop.permute.xlu0 %103
  %105 = vrot.lane.b32.xlu0 %v100, 17
  %v106 = vpop.permute.xlu0 %105
  %109 = vst.msk [vmem:[%s67 + $0x1] sm:$0xff] %vm95, %v104
  %110 = vst.msk [vmem:[%s67 + $0x9] sm:$0xff] %vm95, %v106
  %s111 = scalar_lea.vmem %s0, 80
  %v112 = vld [vmem:[%s111] sm:$0xff]
  %v113 = vld [vmem:[%s111 + $0x8] sm:$0xff]
  %116 = vrot.lane.b32.xlu0 %v112, 17
  %v117 = vpop.permute.xlu0 %116
  %118 = vrot.lane.b32.xlu0 %v113, 17
  %v119 = vpop.permute.xlu0 %118
  %122 = vst.msk [vmem:[%s81 + $0x1] sm:$0xff] %vm95, %v117
  %123 = vst.msk [vmem:[%s81 + $0x9] sm:$0xff] %vm95, %v119
  %v124 = vld [vmem:[%s2] sm:$0x1]
  %v125 = vperm.slane %v124, 0
  %v126 = vld [vmem:[%s2 + $0x1] sm:$0x1]
  %v127 = vperm.slane %v126, 0
  %v128 = vld [vmem:[%s2 + $0x2] sm:$0x1]
  %v129 = vperm.slane %v128, 0
  %v130 = vld [vmem:[#allocation2] sm:$0xff]
  %v131 = vld [vmem:[#allocation2 + $0x8] sm:$0xff]
  %v132 = vld [vmem:[%s1] sm:$0x1]
  %v133 = vperm.slane %v132, 0
  %v134 = vmul.f32 %v133, %v130
  %v135 = vmul.f32 %v133, %v131
  %v136 = vadd.f32 %v125, %v134
  %v137 = vadd.f32 %v125, %v135
  %v138 = vld [vmem:[%s1 + $0x1b] sm:$0x1]
  %v139 = vperm.slane %v138, 0
  %v140 = vmul.f32 %v139, %v130
  %v141 = vmul.f32 %v139, %v131
  %v142 = vadd.f32 %v127, %v140
  %v143 = vadd.f32 %v127, %v141
  %v144 = vld [vmem:[%s1 + $0x36] sm:$0x1]
  %v145 = vperm.slane %v144, 0
  %v146 = vmul.f32 %v145, %v130
  %v147 = vmul.f32 %v145, %v131
  %v148 = vadd.f32 %v129, %v146
  %v149 = vadd.f32 %v129, %v147
  %v150 = vld [vmem:[%s1 + $0x1] sm:$0x1]
  %v151 = vperm.slane %v150, 0
  %154 = vrot.lane.b32.xlu0 %v130, 127
  %v155 = vpop.permute.xlu0 %154
  %156 = vrot.lane.b32.xlu0 %v131, 127
  %v157 = vpop.permute.xlu0 %156
  %v160 = vmul.f32 %v151, %v155
  %v161 = vmul.f32 %v151, %v157
  %v162 = vadd.f32 %v136, %v160
  %v163 = vadd.f32 %v137, %v161
  %v164 = vld [vmem:[%s1 + $0x1c] sm:$0x1]
  %v165 = vperm.slane %v164, 0
  %v166 = vmul.f32 %v165, %v155
  %v167 = vmul.f32 %v165, %v157
  %v168 = vadd.f32 %v142, %v166
  %v169 = vadd.f32 %v143, %v167
  %v170 = vld [vmem:[%s1 + $0x37] sm:$0x1]
  %v171 = vperm.slane %v170, 0
  %v172 = vmul.f32 %v171, %v155
  %v173 = vmul.f32 %v171, %v157
  %v174 = vadd.f32 %v148, %v172
  %v175 = vadd.f32 %v149, %v173
  %v176 = vld [vmem:[%s1 + $0x2] sm:$0x1]
  %v177 = vperm.slane %v176, 0
  %178 = vrot.lane.b32.xlu0 %v130, 126
  %v179 = vpop.permute.xlu0 %178
  %180 = vrot.lane.b32.xlu0 %v131, 126
  %v181 = vpop.permute.xlu0 %180
  %v184 = vmul.f32 %v177, %v179
  %v185 = vmul.f32 %v177, %v181
  %v186 = vadd.f32 %v162, %v184
  %v187 = vadd.f32 %v163, %v185
  %v188 = vld [vmem:[%s1 + $0x1d] sm:$0x1]
  %v189 = vperm.slane %v188, 0
  %v190 = vmul.f32 %v189, %v179
  %v191 = vmul.f32 %v189, %v181
  %v192 = vadd.f32 %v168, %v190
  %v193 = vadd.f32 %v169, %v191
  %v194 = vld [vmem:[%s1 + $0x38] sm:$0x1]
  %v195 = vperm.slane %v194, 0
  %v196 = vmul.f32 %v195, %v179
  %v197 = vmul.f32 %v195, %v181
  %v198 = vadd.f32 %v174, %v196
  %v199 = vadd.f32 %v175, %v197
  %v200 = vld [vmem:[#allocation2 + $0x1] sm:$0xff]
  %v201 = vld [vmem:[#allocation2 + $0x9] sm:$0xff]
  %v202 = vld [vmem:[%s1 + $0x3] sm:$0x1]
  %v203 = vperm.slane %v202, 0
  %v204 = vmul.f32 %v203, %v200
  %v205 = vmul.f32 %v203, %v201
  %v206 = vadd.f32 %v186, %v204
  %v207 = vadd.f32 %v187, %v205
  %v208 = vld [vmem:[%s1 + $0x1e] sm:$0x1]
  %v209 = vperm.slane %v208, 0
  %v210 = vmul.f32 %v209, %v200
  %v211 = vmul.f32 %v209, %v201
  %v212 = vadd.f32 %v192, %v210
  %v213 = vadd.f32 %v193, %v211
  %v214 = vld [vmem:[%s1 + $0x39] sm:$0x1]
  %v215 = vperm.slane %v214, 0
  %v216 = vmul.f32 %v215, %v200
  %v217 = vmul.f32 %v215, %v201
  %v218 = vadd.f32 %v198, %v216
  %v219 = vadd.f32 %v199, %v217
  %v220 = vld [vmem:[%s1 + $0x4] sm:$0x1]
  %v221 = vperm.slane %v220, 0
  %224 = vrot.lane.b32.xlu0 %v200, 127
  %v225 = vpop.permute.xlu0 %224
  %226 = vrot.lane.b32.xlu0 %v201, 127
  %v227 = vpop.permute.xlu0 %226
  %v230 = vmul.f32 %v221, %v225
  %v231 = vmul.f32 %v221, %v227
  %v232 = vadd.f32 %v206, %v230
  %v233 = vadd.f32 %v207, %v231
  %v234 = vld [vmem:[%s1 + $0x1f] sm:$0x1]
  %v235 = vperm.slane %v234, 0
  %v236 = vmul.f32 %v235, %v225
  %v237 = vmul.f32 %v235, %v227
  %v238 = vadd.f32 %v212, %v236
  %v239 = vadd.f32 %v213, %v237
  %v240 = vld [vmem:[%s1 + $0x3a] sm:$0x1]
  %v241 = vperm.slane %v240, 0
  %v242 = vmul.f32 %v241, %v225
  %v243 = vmul.f32 %v241, %v227
  %v244 = vadd.f32 %v218, %v242
  %v245 = vadd.f32 %v219, %v243
  %v246 = vld [vmem:[%s1 + $0x5] sm:$0x1]
  %v247 = vperm.slane %v246, 0
  %248 = vrot.lane.b32.xlu0 %v200, 126
  %v249 = vpop.permute.xlu0 %248
  %250 = vrot.lane.b32.xlu0 %v201, 126
  %v251 = vpop.permute.xlu0 %250
  %v254 = vmul.f32 %v247, %v249
  %v255 = vmul.f32 %v247, %v251
  %v256 = vadd.f32 %v232, %v254
  %v257 = vadd.f32 %v233, %v255
  %v258 = vld [vmem:[%s1 + $0x20] sm:$0x1]
  %v259 = vperm.slane %v258, 0
  %v260 = vmul.f32 %v259, %v249
  %v261 = vmul.f32 %v259, %v251
  %v262 = vadd.f32 %v238, %v260
  %v263 = vadd.f32 %v239, %v261
  %v264 = vld [vmem:[%s1 + $0x3b] sm:$0x1]
  %v265 = vperm.slane %v264, 0
  %v266 = vmul.f32 %v265, %v249
  %v267 = vmul.f32 %v265, %v251
  %v268 = vadd.f32 %v244, %v266
  %v269 = vadd.f32 %v245, %v267
  %v270 = vld [vmem:[#allocation2 + $0x2] sm:$0xff]
  %v271 = vld [vmem:[#allocation2 + $0xa] sm:$0xff]
  %v272 = vld [vmem:[%s1 + $0x6] sm:$0x1]
  %v273 = vperm.slane %v272, 0
  %v274 = vmul.f32 %v273, %v270
  %v275 = vmul.f32 %v273, %v271
  %v276 = vadd.f32 %v256, %v274
  %v277 = vadd.f32 %v257, %v275
  %v278 = vld [vmem:[%s1 + $0x21] sm:$0x1]
  %v279 = vperm.slane %v278, 0
  %v280 = vmul.f32 %v279, %v270
  %v281 = vmul.f32 %v279, %v271
  %v282 = vadd.f32 %v262, %v280
  %v283 = vadd.f32 %v263, %v281
  %v284 = vld [vmem:[%s1 + $0x3c] sm:$0x1]
  %v285 = vperm.slane %v284, 0
  %v286 = vmul.f32 %v285, %v270
  %v287 = vmul.f32 %v285, %v271
  %v288 = vadd.f32 %v268, %v286
  %v289 = vadd.f32 %v269, %v287
  %v290 = vld [vmem:[%s1 + $0x7] sm:$0x1]
  %v291 = vperm.slane %v290, 0
  %294 = vrot.lane.b32.xlu0 %v270, 127
  %v295 = vpop.permute.xlu0 %294
  %296 = vrot.lane.b32.xlu0 %v271, 127
  %v297 = vpop.permute.xlu0 %296
  %v300 = vmul.f32 %v291, %v295
  %v301 = vmul.f32 %v291, %v297
  %v302 = vadd.f32 %v276, %v300
  %v303 = vadd.f32 %v277, %v301
  %v304 = vld [vmem:[%s1 + $0x22] sm:$0x1]
  %v305 = vperm.slane %v304, 0
  %v306 = vmul.f32 %v305, %v295
  %v307 = vmul.f32 %v305, %v297
  %v308 = vadd.f32 %v282, %v306
  %v309 = vadd.f32 %v283, %v307
  %v310 = vld [vmem:[%s1 + $0x3d] sm:$0x1]
  %v311 = vperm.slane %v310, 0
  %v312 = vmul.f32 %v311, %v295
  %v313 = vmul.f32 %v311, %v297
  %v314 = vadd.f32 %v288, %v312
  %v315 = vadd.f32 %v289, %v313
  %v316 = vld [vmem:[%s1 + $0x8] sm:$0x1]
  %v317 = vperm.slane %v316, 0
  %318 = vrot.lane.b32.xlu0 %v270, 126
  %v319 = vpop.permute.xlu0 %318
  %320 = vrot.lane.b32.xlu0 %v271, 126
  %v321 = vpop.permute.xlu0 %320
  %v324 = vmul.f32 %v317, %v319
  %v325 = vmul.f32 %v317, %v321
  %v326 = vadd.f32 %v302, %v324
  %v327 = vadd.f32 %v303, %v325
  %v328 = vld [vmem:[%s1 + $0x23] sm:$0x1]
  %v329 = vperm.slane %v328, 0
  %v330 = vmul.f32 %v329, %v319
  %v331 = vmul.f32 %v329, %v321
  %v332 = vadd.f32 %v308, %v330
  %v333 = vadd.f32 %v309, %v331
  %v334 = vld [vmem:[%s1 + $0x3e] sm:$0x1]
  %v335 = vperm.slane %v334, 0
  %v336 = vmul.f32 %v335, %v319
  %v337 = vmul.f32 %v335, %v321
  %v338 = vadd.f32 %v314, %v336
  %v339 = vadd.f32 %v315, %v337
  %v340 = vld [vmem:[%s67] sm:$0xff]
  %v341 = vld [vmem:[%s67 + $0x8] sm:$0xff]
  %v342 = vld [vmem:[%s1 + $0x9] sm:$0x1]
  %v343 = vperm.slane %v342, 0
  %v344 = vmul.f32 %v343, %v340
  %v345 = vmul.f32 %v343, %v341
  %v346 = vadd.f32 %v326, %v344
  %v347 = vadd.f32 %v327, %v345
  %v348 = vld [vmem:[%s1 + $0x24] sm:$0x1]
  %v349 = vperm.slane %v348, 0
  %v350 = vmul.f32 %v349, %v340
  %v351 = vmul.f32 %v349, %v341
  %v352 = vadd.f32 %v332, %v350
  %v353 = vadd.f32 %v333, %v351
  %v354 = vld [vmem:[%s1 + $0x3f] sm:$0x1]
  %v355 = vperm.slane %v354, 0
  %v356 = vmul.f32 %v355, %v340
  %v357 = vmul.f32 %v355, %v341
  %v358 = vadd.f32 %v338, %v356
  %v359 = vadd.f32 %v339, %v357
  %v360 = vld [vmem:[%s1 + $0xa] sm:$0x1]
  %v361 = vperm.slane %v360, 0
  %364 = vrot.lane.b32.xlu0 %v340, 127
  %v365 = vpop.permute.xlu0 %364
  %366 = vrot.lane.b32.xlu0 %v341, 127
  %v367 = vpop.permute.xlu0 %366
  %v370 = vmul.f32 %v361, %v365
  %v371 = vmul.f32 %v361, %v367
  %v372 = vadd.f32 %v346, %v370
  %v373 = vadd.f32 %v347, %v371
  %v374 = vld [vmem:[%s1 + $0x25] sm:$0x1]
  %v375 = vperm.slane %v374, 0
  %v376 = vmul.f32 %v375, %v365
  %v377 = vmul.f32 %v375, %v367
  %v378 = vadd.f32 %v352, %v376
  %v379 = vadd.f32 %v353, %v377
  %v380 = vld [vmem:[%s1 + $0x40] sm:$0x1]
  %v381 = vperm.slane %v380, 0
  %v382 = vmul.f32 %v381, %v365
  %v383 = vmul.f32 %v381, %v367
  %v384 = vadd.f32 %v358, %v382
  %v385 = vadd.f32 %v359, %v383
  %v386 = vld [vmem:[%s1 + $0xb] sm:$0x1]
  %v387 = vperm.slane %v386, 0
  %388 = vrot.lane.b32.xlu0 %v340, 126
  %v389 = vpop.permute.xlu0 %388
  %390 = vrot.lane.b32.xlu0 %v341, 126
  %v391 = vpop.permute.xlu0 %390
  %v394 = vmul.f32 %v387, %v389
  %v395 = vmul.f32 %v387, %v391
  %v396 = vadd.f32 %v372, %v394
  %v397 = vadd.f32 %v373, %v395
  %v398 = vld [vmem:[%s1 + $0x26] sm:$0x1]
  %v399 = vperm.slane %v398, 0
  %v400 = vmul.f32 %v399, %v389
  %v401 = vmul.f32 %v399, %v391
  %v402 = vadd.f32 %v378, %v400
  %v403 = vadd.f32 %v379, %v401
  %v404 = vld [vmem:[%s1 + $0x41] sm:$0x1]
  %v405 = vperm.slane %v404, 0
  %v406 = vmul.f32 %v405, %v389
  %v407 = vmul.f32 %v405, %v391
  %v408 = vadd.f32 %v384, %v406
  %v409 = vadd.f32 %v385, %v407
  %v410 = vld [vmem:[%s67 + $0x1] sm:$0xff]
  %v411 = vld [vmem:[%s67 + $0x9] sm:$0xff]
  %v412 = vld [vmem:[%s1 + $0xc] sm:$0x1]
  %v413 = vperm.slane %v412, 0
  %v414 = vmul.f32 %v413, %v410
  %v415 = vmul.f32 %v413, %v411
  %v416 = vadd.f32 %v396, %v414
  %v417 = vadd.f32 %v397, %v415
  %v418 = vld [vmem:[%s1 + $0x27] sm:$0x1]
  %v419 = vperm.slane %v418, 0
  %v420 = vmul.f32 %v419, %v410
  %v421 = vmul.f32 %v419, %v411
  %v422 = vadd.f32 %v402, %v420
  %v423 = vadd.f32 %v403, %v421
  %v424 = vld [vmem:[%s1 + $0x42] sm:$0x1]
  %v425 = vperm.slane %v424, 0
  %v426 = vmul.f32 %v425, %v410
  %v427 = vmul.f32 %v425, %v411
  %v428 = vadd.f32 %v408, %v426
  %v429 = vadd.f32 %v409, %v427
  %v430 = vld [vmem:[%s1 + $0xd] sm:$0x1]
  %v431 = vperm.slane %v430, 0
  %434 = vrot.lane.b32.xlu0 %v410, 127
  %v435 = vpop.permute.xlu0 %434
  %436 = vrot.lane.b32.xlu0 %v411, 127
  %v437 = vpop.permute.xlu0 %436
  %v440 = vmul.f32 %v431, %v435
  %v441 = vmul.f32 %v431, %v437
  %v442 = vadd.f32 %v416, %v440
  %v443 = vadd.f32 %v417, %v441
  %v444 = vld [vmem:[%s1 + $0x28] sm:$0x1]
  %v445 = vperm.slane %v444, 0
  %v446 = vmul.f32 %v445, %v435
  %v447 = vmul.f32 %v445, %v437
  %v448 = vadd.f32 %v422, %v446
  %v449 = vadd.f32 %v423, %v447
  %v450 = vld [vmem:[%s1 + $0x43] sm:$0x1]
  %v451 = vperm.slane %v450, 0
  %v452 = vmul.f32 %v451, %v435
  %v453 = vmul.f32 %v451, %v437
  %v454 = vadd.f32 %v428, %v452
  %v455 = vadd.f32 %v429, %v453
  %v456 = vld [vmem:[%s1 + $0xe] sm:$0x1]
  %v457 = vperm.slane %v456, 0
  %458 = vrot.lane.b32.xlu0 %v410, 126
  %v459 = vpop.permute.xlu0 %458
  %460 = vrot.lane.b32.xlu0 %v411, 126
  %v461 = vpop.permute.xlu0 %460
  %v464 = vmul.f32 %v457, %v459
  %v465 = vmul.f32 %v457, %v461
  %v466 = vadd.f32 %v442, %v464
  %v467 = vadd.f32 %v443, %v465
  %v468 = vld [vmem:[%s1 + $0x29] sm:$0x1]
  %v469 = vperm.slane %v468, 0
  %v470 = vmul.f32 %v469, %v459
  %v471 = vmul.f32 %v469, %v461
  %v472 = vadd.f32 %v448, %v470
  %v473 = vadd.f32 %v449, %v471
  %v474 = vld [vmem:[%s1 + $0x44] sm:$0x1]
  %v475 = vperm.slane %v474, 0
  %v476 = vmul.f32 %v475, %v459
  %v477 = vmul.f32 %v475, %v461
  %v478 = vadd.f32 %v454, %v476
  %v479 = vadd.f32 %v455, %v477
  %v480 = vld [vmem:[%s67 + $0x2] sm:$0xff]
  %v481 = vld [vmem:[%s67 + $0xa] sm:$0xff]
  %v482 = vld [vmem:[%s1 + $0xf] sm:$0x1]
  %v483 = vperm.slane %v482, 0
  %v484 = vmul.f32 %v483, %v480
  %v485 = vmul.f32 %v483, %v481
  %v486 = vadd.f32 %v466, %v484
  %v487 = vadd.f32 %v467, %v485
  %v488 = vld [vmem:[%s1 + $0x2a] sm:$0x1]
  %v489 = vperm.slane %v488, 0
  %v490 = vmul.f32 %v489, %v480
  %v491 = vmul.f32 %v489, %v481
  %v492 = vadd.f32 %v472, %v490
  %v493 = vadd.f32 %v473, %v491
  %v494 = vld [vmem:[%s1 + $0x45] sm:$0x1]
  %v495 = vperm.slane %v494, 0
  %v496 = vmul.f32 %v495, %v480
  %v497 = vmul.f32 %v495, %v481
  %v498 = vadd.f32 %v478, %v496
  %v499 = vadd.f32 %v479, %v497
  %v500 = vld [vmem:[%s1 + $0x10] sm:$0x1]
  %v501 = vperm.slane %v500, 0
  %504 = vrot.lane.b32.xlu0 %v480, 127
  %v505 = vpop.permute.xlu0 %504
  %506 = vrot.lane.b32.xlu0 %v481, 127
  %v507 = vpop.permute.xlu0 %506
  %v510 = vmul.f32 %v501, %v505
  %v511 = vmul.f32 %v501, %v507
  %v512 = vadd.f32 %v486, %v510
  %v513 = vadd.f32 %v487, %v511
  %v514 = vld [vmem:[%s1 + $0x2b] sm:$0x1]
  %v515 = vperm.slane %v514, 0
  %v516 = vmul.f32 %v515, %v505
  %v517 = vmul.f32 %v515, %v507
  %v518 = vadd.f32 %v492, %v516
  %v519 = vadd.f32 %v493, %v517
  %v520 = vld [vmem:[%s1 + $0x46] sm:$0x1]
  %v521 = vperm.slane %v520, 0
  %v522 = vmul.f32 %v521, %v505
  %v523 = vmul.f32 %v521, %v507
  %v524 = vadd.f32 %v498, %v522
  %v525 = vadd.f32 %v499, %v523
  %v526 = vld [vmem:[%s1 + $0x11] sm:$0x1]
  %v527 = vperm.slane %v526, 0
  %528 = vrot.lane.b32.xlu0 %v480, 126
  %v529 = vpop.permute.xlu0 %528
  %530 = vrot.lane.b32.xlu0 %v481, 126
  %v531 = vpop.permute.xlu0 %530
  %v534 = vmul.f32 %v527, %v529
  %v535 = vmul.f32 %v527, %v531
  %v536 = vadd.f32 %v512, %v534
  %v537 = vadd.f32 %v513, %v535
  %v538 = vld [vmem:[%s1 + $0x2c] sm:$0x1]
  %v539 = vperm.slane %v538, 0
  %v540 = vmul.f32 %v539, %v529
  %v541 = vmul.f32 %v539, %v531
  %v542 = vadd.f32 %v518, %v540
  %v543 = vadd.f32 %v519, %v541
  %v544 = vld [vmem:[%s1 + $0x47] sm:$0x1]
  %v545 = vperm.slane %v544, 0
  %v546 = vmul.f32 %v545, %v529
  %v547 = vmul.f32 %v545, %v531
  %v548 = vadd.f32 %v524, %v546
  %v549 = vadd.f32 %v525, %v547
  %v550 = vld [vmem:[%s81] sm:$0xff]
  %v551 = vld [vmem:[%s81 + $0x8] sm:$0xff]
  %v552 = vld [vmem:[%s1 + $0x12] sm:$0x1]
  %v553 = vperm.slane %v552, 0
  %v554 = vmul.f32 %v553, %v550
  %v555 = vmul.f32 %v553, %v551
  %v556 = vadd.f32 %v536, %v554
  %v557 = vadd.f32 %v537, %v555
  %v558 = vld [vmem:[%s1 + $0x2d] sm:$0x1]
  %v559 = vperm.slane %v558, 0
  %v560 = vmul.f32 %v559, %v550
  %v561 = vmul.f32 %v559, %v551
  %v562 = vadd.f32 %v542, %v560
  %v563 = vadd.f32 %v543, %v561
  %v564 = vld [vmem:[%s1 + $0x48] sm:$0x1]
  %v565 = vperm.slane %v564, 0
  %v566 = vmul.f32 %v565, %v550
  %v567 = vmul.f32 %v565, %v551
  %v568 = vadd.f32 %v548, %v566
  %v569 = vadd.f32 %v549, %v567
  %v570 = vld [vmem:[%s1 + $0x13] sm:$0x1]
  %v571 = vperm.slane %v570, 0
  %574 = vrot.lane.b32.xlu0 %v550, 127
  %v575 = vpop.permute.xlu0 %574
  %576 = vrot.lane.b32.xlu0 %v551, 127
  %v577 = vpop.permute.xlu0 %576
  %v580 = vmul.f32 %v571, %v575
  %v581 = vmul.f32 %v571, %v577
  %v582 = vadd.f32 %v556, %v580
  %v583 = vadd.f32 %v557, %v581
  %v584 = vld [vmem:[%s1 + $0x2e] sm:$0x1]
  %v585 = vperm.slane %v584, 0
  %v586 = vmul.f32 %v585, %v575
  %v587 = vmul.f32 %v585, %v577
  %v588 = vadd.f32 %v562, %v586
  %v589 = vadd.f32 %v563, %v587
  %v590 = vld [vmem:[%s1 + $0x49] sm:$0x1]
  %v591 = vperm.slane %v590, 0
  %v592 = vmul.f32 %v591, %v575
  %v593 = vmul.f32 %v591, %v577
  %v594 = vadd.f32 %v568, %v592
  %v595 = vadd.f32 %v569, %v593
  %v596 = vld [vmem:[%s1 + $0x14] sm:$0x1]
  %v597 = vperm.slane %v596, 0
  %598 = vrot.lane.b32.xlu0 %v550, 126
  %v599 = vpop.permute.xlu0 %598
  %600 = vrot.lane.b32.xlu0 %v551, 126
  %v601 = vpop.permute.xlu0 %600
  %v604 = vmul.f32 %v597, %v599
  %v605 = vmul.f32 %v597, %v601
  %v606 = vadd.f32 %v582, %v604
  %v607 = vadd.f32 %v583, %v605
  %v608 = vld [vmem:[%s1 + $0x2f] sm:$0x1]
  %v609 = vperm.slane %v608, 0
  %v610 = vmul.f32 %v609, %v599
  %v611 = vmul.f32 %v609, %v601
  %v612 = vadd.f32 %v588, %v610
  %v613 = vadd.f32 %v589, %v611
  %v614 = vld [vmem:[%s1 + $0x4a] sm:$0x1]
  %v615 = vperm.slane %v614, 0
  %v616 = vmul.f32 %v615, %v599
  %v617 = vmul.f32 %v615, %v601
  %v618 = vadd.f32 %v594, %v616
  %v619 = vadd.f32 %v595, %v617
  %v620 = vld [vmem:[%s81 + $0x1] sm:$0xff]
  %v621 = vld [vmem:[%s81 + $0x9] sm:$0xff]
  %v622 = vld [vmem:[%s1 + $0x15] sm:$0x1]
  %v623 = vperm.slane %v622, 0
  %v624 = vmul.f32 %v623, %v620
  %v625 = vmul.f32 %v623, %v621
  %v626 = vadd.f32 %v606, %v624
  %v627 = vadd.f32 %v607, %v625
  %v628 = vld [vmem:[%s1 + $0x30] sm:$0x1]
  %v629 = vperm.slane %v628, 0
  %v630 = vmul.f32 %v629, %v620
  %v631 = vmul.f32 %v629, %v621
  %v632 = vadd.f32 %v612, %v630
  %v633 = vadd.f32 %v613, %v631
  %v634 = vld [vmem:[%s1 + $0x4b] sm:$0x1]
  %v635 = vperm.slane %v634, 0
  %v636 = vmul.f32 %v635, %v620
  %v637 = vmul.f32 %v635, %v621
  %v638 = vadd.f32 %v618, %v636
  %v639 = vadd.f32 %v619, %v637
  %v640 = vld [vmem:[%s1 + $0x16] sm:$0x1]
  %v641 = vperm.slane %v640, 0
  %644 = vrot.lane.b32.xlu0 %v620, 127
  %v645 = vpop.permute.xlu0 %644
  %646 = vrot.lane.b32.xlu0 %v621, 127
  %v647 = vpop.permute.xlu0 %646
  %v650 = vmul.f32 %v641, %v645
  %v651 = vmul.f32 %v641, %v647
  %v652 = vadd.f32 %v626, %v650
  %v653 = vadd.f32 %v627, %v651
  %v654 = vld [vmem:[%s1 + $0x31] sm:$0x1]
  %v655 = vperm.slane %v654, 0
  %v656 = vmul.f32 %v655, %v645
  %v657 = vmul.f32 %v655, %v647
  %v658 = vadd.f32 %v632, %v656
  %v659 = vadd.f32 %v633, %v657
  %v660 = vld [vmem:[%s1 + $0x4c] sm:$0x1]
  %v661 = vperm.slane %v660, 0
  %v662 = vmul.f32 %v661, %v645
  %v663 = vmul.f32 %v661, %v647
  %v664 = vadd.f32 %v638, %v662
  %v665 = vadd.f32 %v639, %v663
  %v666 = vld [vmem:[%s1 + $0x17] sm:$0x1]
  %v667 = vperm.slane %v666, 0
  %668 = vrot.lane.b32.xlu0 %v620, 126
  %v669 = vpop.permute.xlu0 %668
  %670 = vrot.lane.b32.xlu0 %v621, 126
  %v671 = vpop.permute.xlu0 %670
  %v674 = vmul.f32 %v667, %v669
  %v675 = vmul.f32 %v667, %v671
  %v676 = vadd.f32 %v652, %v674
  %v677 = vadd.f32 %v653, %v675
  %v678 = vld [vmem:[%s1 + $0x32] sm:$0x1]
  %v679 = vperm.slane %v678, 0
  %v680 = vmul.f32 %v679, %v669
  %v681 = vmul.f32 %v679, %v671
  %v682 = vadd.f32 %v658, %v680
  %v683 = vadd.f32 %v659, %v681
  %v684 = vld [vmem:[%s1 + $0x4d] sm:$0x1]
  %v685 = vperm.slane %v684, 0
  %v686 = vmul.f32 %v685, %v669
  %v687 = vmul.f32 %v685, %v671
  %v688 = vadd.f32 %v664, %v686
  %v689 = vadd.f32 %v665, %v687
  %v690 = vld [vmem:[%s81 + $0x2] sm:$0xff]
  %v691 = vld [vmem:[%s81 + $0xa] sm:$0xff]
  %v692 = vld [vmem:[%s1 + $0x18] sm:$0x1]
  %v693 = vperm.slane %v692, 0
  %v694 = vmul.f32 %v693, %v690
  %v695 = vmul.f32 %v693, %v691
  %v696 = vadd.f32 %v676, %v694
  %v697 = vadd.f32 %v677, %v695
  %v698 = vld [vmem:[%s1 + $0x33] sm:$0x1]
  %v699 = vperm.slane %v698, 0
  %v700 = vmul.f32 %v699, %v690
  %v701 = vmul.f32 %v699, %v691
  %v702 = vadd.f32 %v682, %v700
  %v703 = vadd.f32 %v683, %v701
  %v704 = vld [vmem:[%s1 + $0x4e] sm:$0x1]
  %v705 = vperm.slane %v704, 0
  %v706 = vmul.f32 %v705, %v690
  %v707 = vmul.f32 %v705, %v691
  %v708 = vadd.f32 %v688, %v706
  %v709 = vadd.f32 %v689, %v707
  %v710 = vld [vmem:[%s1 + $0x19] sm:$0x1]
  %v711 = vperm.slane %v710, 0
  %714 = vrot.lane.b32.xlu0 %v690, 127
  %v715 = vpop.permute.xlu0 %714
  %716 = vrot.lane.b32.xlu0 %v691, 127
  %v717 = vpop.permute.xlu0 %716
  %v720 = vmul.f32 %v711, %v715
  %v721 = vmul.f32 %v711, %v717
  %v722 = vadd.f32 %v696, %v720
  %v723 = vadd.f32 %v697, %v721
  %v724 = vld [vmem:[%s1 + $0x34] sm:$0x1]
  %v725 = vperm.slane %v724, 0
  %v726 = vmul.f32 %v725, %v715
  %v727 = vmul.f32 %v725, %v717
  %v728 = vadd.f32 %v702, %v726
  %v729 = vadd.f32 %v703, %v727
  %v730 = vld [vmem:[%s1 + $0x4f] sm:$0x1]
  %v731 = vperm.slane %v730, 0
  %v732 = vmul.f32 %v731, %v715
  %v733 = vmul.f32 %v731, %v717
  %v734 = vadd.f32 %v708, %v732
  %v735 = vadd.f32 %v709, %v733
  %v736 = vld [vmem:[%s1 + $0x1a] sm:$0x1]
  %v737 = vperm.slane %v736, 0
  %738 = vrot.lane.b32.xlu0 %v690, 126
  %v739 = vpop.permute.xlu0 %738
  %740 = vrot.lane.b32.xlu0 %v691, 126
  %v741 = vpop.permute.xlu0 %740
  %v744 = vmul.f32 %v737, %v739
  %v745 = vmul.f32 %v737, %v741
  %v746 = vadd.f32 %v722, %v744
  %v747 = vadd.f32 %v723, %v745
  %v748 = vld [vmem:[%s1 + $0x35] sm:$0x1]
  %v749 = vperm.slane %v748, 0
  %v750 = vmul.f32 %v749, %v739
  %v751 = vmul.f32 %v749, %v741
  %v752 = vadd.f32 %v728, %v750
  %v753 = vadd.f32 %v729, %v751
  %v754 = vld [vmem:[%s1 + $0x50] sm:$0x1]
  %v755 = vperm.slane %v754, 0
  %v756 = vmul.f32 %v755, %v739
  %v757 = vmul.f32 %v755, %v741
  %v758 = vadd.f32 %v734, %v756
  %v759 = vadd.f32 %v735, %v757
  %vm760 = vcmask 261120
  %761 = vst.msk [vmem:[%s3] sm:$0xff] %vm760, %v746
  %762 = vst.msk [vmem:[%s3 + $0x8] sm:$0xff] %vm760, %v747
  %s763 = scalar_lea.vmem %s3, 16
  %764 = vst.msk [vmem:[%s763] sm:$0xff] %vm760, %v752
  %765 = vst.msk [vmem:[%s763 + $0x8] sm:$0xff] %vm760, %v753
  %s766 = scalar_lea.vmem %s3, 32
  %767 = vst.msk [vmem:[%s766] sm:$0xff] %vm760, %v758
  %768 = vst.msk [vmem:[%s766 + $0x8] sm:$0xff] %vm760, %v759
  // Predicated region
  $region14: #{random_aug_list_forward.1} parent=0 // pred_check
    _
  $region15: #{random_aug_list_forward.1} parent=0 // pred_check_branch
    %770 = sbr.rel (0) target = $region17
  $region16: #{random_aug_list_forward.1} parent=0 // pred_region
    _
  $region17: #{random_aug_list_forward.1} parent=0 // pred_fallthru
    _
  // Predicated region
  $region18: #{random_aug_list_forward.1} parent=0 // pred_check
    _
  $region19: #{random_aug_list_forward.1} parent=0 // pred_check_branch
    %772 = sbr.rel (0) target = $region21
  $region20: #{random_aug_list_forward.1} parent=0 // pred_region
    _
  $region21: #{random_aug_list_forward.1} parent=0 // pred_fallthru
    _

</llo_original>
